<compile_context>
chip_gen: v5e
topology: v5e:2x2
jax: 0.10.0
libtpu: 0.0.40
codegen_flags: <defaults>
</compile_context>

<pallas_src>
import functools

import jax
import jax.numpy as jnp
from jax.experimental import pallas as pl
from jax.experimental.pallas import tpu as pltpu


def _round_up(x: int, m: int) -> int:
    return ((x + m - 1) // m) * m


def _vmem_limit_bytes() -> int:
    """Per-generation scoped-VMEM limit (v5e/v6e: 128 MiB phys, v7x: 64 MiB)."""
    try:
        cap = int(pltpu.get_tpu_info().vmem_capacity_bytes)
    except Exception:  # CPU interpret mode / unknown platform
        cap = 64 * 1024 * 1024
    return max(32 * 1024 * 1024, min(cap - 8 * 1024 * 1024, 100 * 1024 * 1024))


# --------------------------------------------------------------------------
# Pass 1: per-feature sum / sum-of-squares (streamed reduction over N).
# Accumulates into resident (8, TD) blocks with pure VPU adds; the final
# 8 -> 1 sublane reduction is done once in the wrapper.
# --------------------------------------------------------------------------
def _stats_kernel(za_ref, zb_ref, sa_ref, qa_ref, sb_ref, qb_ref):
    k = pl.program_id(1)

    @pl.when(k == 0)
    def _():
        sa_ref[...] = jnp.zeros_like(sa_ref)
        qa_ref[...] = jnp.zeros_like(qa_ref)
        sb_ref[...] = jnp.zeros_like(sb_ref)
        qb_ref[...] = jnp.zeros_like(qb_ref)

    tn, td = za_ref.shape
    za = za_ref[...].astype(jnp.float32).reshape(tn // 8, 8, td)
    zb = zb_ref[...].astype(jnp.float32).reshape(tn // 8, 8, td)
    sa_ref[...] += jnp.sum(za, axis=0)
    qa_ref[...] += jnp.sum(za * za, axis=0)
    sb_ref[...] += jnp.sum(zb, axis=0)
    qb_ref[...] += jnp.sum(zb * zb, axis=0)


def _feature_stats(za, zb, tn, td, vmem_limit):
    n_pad, d_pad = za.shape
    gi, gk = d_pad // td, n_pad // tn
    out_shape = jax.ShapeDtypeStruct((8, d_pad), jnp.float32)
    out_spec = pl.BlockSpec((8, td), lambda i, k: (0, i))
    return pl.pallas_call(
        _stats_kernel,
        out_shape=[out_shape, out_shape, out_shape, out_shape],
        grid=(gi, gk),
        in_specs=[
            pl.BlockSpec((tn, td), lambda i, k: (k, i)),
            pl.BlockSpec((tn, td), lambda i, k: (k, i)),
        ],
        out_specs=[out_spec, out_spec, out_spec, out_spec],
        compiler_params=pltpu.CompilerParams(
            dimension_semantics=("parallel", "arbitrary"),
            vmem_limit_bytes=vmem_limit,
        ),
    )(za, zb)


# --------------------------------------------------------------------------
# Pass 2: tiled cross-correlation (bf16 MXU, f32 accumulation) + epilogue.
# --------------------------------------------------------------------------
def _cross_corr_kernel(za_ref, zb_ref, sa_ref, sb_ref, ua_ref, ub_ref,
                       out_ref, acc_ref, *, lambda_param, td, d_valid):
    # All grid queries at kernel top level (never inside pl.when closures).
    i = pl.program_id(0)
    j = pl.program_id(1)
    k = pl.program_id(2)
    nk = pl.num_programs(2)

    @pl.when(k == 0)
    def _():
        acc_ref[...] = jnp.zeros_like(acc_ref)
        out_ref[...] = jnp.zeros_like(out_ref)

    # Raw bf16 operands straight onto the MXU; contraction over axis 0 of BOTH
    # operands (no transpose / XLU relayout); f32 accumulation.
    acc_ref[...] += jax.lax.dot_general(
        za_ref[...], zb_ref[...],
        dimension_numbers=(((0,), (0,)), ((), ())),
        preferred_element_type=jnp.float32)

    @pl.when(k == nk - 1)
    def _():
        # Deferred normalization + mean correction (zero row-padding safe):
        #   c_ij = (acc_ij/N - mean_a_i*mean_b_j) * invstd_a_i * invstd_b_j
        #        = acc_ij * sa_i * sb_j - ua_i * ub_j
        c = (acc_ref[...] * sa_ref[...] * sb_ref[...]
             - ua_ref[...] * ub_ref[...])                       # (TD, TD)

        row = jax.lax.broadcasted_iota(jnp.int32, (td, td), 0) + i * td
        col = jax.lax.broadcasted_iota(jnp.int32, (td, td), 1) + j * td
        on_diag = (row == col) & (row < d_valid)
        contrib = jnp.where(on_diag, (c - 1.0) ** 2, lambda_param * (c * c))
        partial = jnp.sum(contrib)

        r8 = jax.lax.broadcasted_iota(jnp.int32, (8, 128), 0)
        l128 = jax.lax.broadcasted_iota(jnp.int32, (8, 128), 1)
        out_ref[...] = jnp.where((r8 == 0) & (l128 == 0), partial, 0.0)


def barlow_twins_loss(z_a, z_b, lambda_param: float = 0.005, *,
                      block_n: int = 1024, block_d: int = 1024):
    """Pallas implementation of BarlowTwinsLoss(correlation='cross')."""
    assert z_a.shape == z_b.shape and z_a.ndim == 2
    n, d = z_a.shape

    tn = min(_round_up(block_n, 8), _round_up(n, 8))       # batch tile
    td = min(_round_up(block_d, 128), _round_up(d, 128))   # feature tile
    n_pad = _round_up(n, tn)
    d_pad = _round_up(d, td)
    vmem_limit = _vmem_limit_bytes()

    # Single zero-padded bf16 copy per input, shared by both passes.
    za16 = jnp.pad(z_a.astype(jnp.bfloat16), ((0, n_pad - n), (0, d_pad - d)))
    zb16 = jnp.pad(z_b.astype(jnp.bfloat16), ((0, n_pad - n), (0, d_pad - d)))

    # Pass 1: per-feature sums / sums-of-squares (f32 accumulation).
    sum_a8, ssq_a8, sum_b8, ssq_b8 = _feature_stats(za16, zb16, tn, td,
                                                    vmem_limit)
    sum_a = jnp.sum(sum_a8, axis=0)
    ssq_a = jnp.sum(ssq_a8, axis=0)
    sum_b = jnp.sum(sum_b8, axis=0)
    ssq_b = jnp.sum(ssq_b8, axis=0)

    # Per-feature mean and unbiased std (torch.std default ddof=1).
    nf = jnp.float32(n)
    nm1 = jnp.float32(n - 1)
    mean_a = sum_a / nf
    mean_b = sum_b / nf
    var_a = (ssq_a - nf * mean_a * mean_a) / nm1
    var_b = (ssq_b - nf * mean_b * mean_b) / nm1
    valid = jnp.arange(d_pad) < d
    inva = jnp.where(valid, jax.lax.rsqrt(var_a), 0.0)   # padded cols -> 0
    invb = jnp.where(valid, jax.lax.rsqrt(var_b), 0.0)

    sa_col = (inva / nf).reshape(d_pad, 1)               # invstd_a / N
    sb_row = invb.reshape(1, d_pad)                      # invstd_b
    ua_col = (mean_a * inva).reshape(d_pad, 1)           # mean_a * invstd_a
    ub_row = (mean_b * invb).reshape(1, d_pad)           # mean_b * invstd_b

    gi = d_pad // td
    gj = d_pad // td
    gk = n_pad // tn

    kernel = functools.partial(
        _cross_corr_kernel,
        lambda_param=float(lambda_param), td=td, d_valid=d)

    partials = pl.pallas_call(
        kernel,
        out_shape=jax.ShapeDtypeStruct((gi * 8, gj * 128), jnp.float32),
        grid=(gi, gj, gk),
        in_specs=[
            pl.BlockSpec((tn, td), lambda i, j, k: (k, i)),   # z_a tiles (bf16)
            pl.BlockSpec((tn, td), lambda i, j, k: (k, j)),   # z_b tiles (bf16)
            pl.BlockSpec((td, 1), lambda i, j, k: (i, 0)),    # invstd_a / N
            pl.BlockSpec((1, td), lambda i, j, k: (0, j)),    # invstd_b
            pl.BlockSpec((td, 1), lambda i, j, k: (i, 0)),    # mean_a*invstd_a
            pl.BlockSpec((1, td), lambda i, j, k: (0, j)),    # mean_b*invstd_b
        ],
        out_specs=pl.BlockSpec((8, 128), lambda i, j, k: (i, j)),
        scratch_shapes=[pltpu.VMEM((td, td), jnp.float32)],
        compiler_params=pltpu.CompilerParams(
            dimension_semantics=("parallel", "parallel", "arbitrary"),
            vmem_limit_bytes=vmem_limit,
        ),
    )(za16, zb16, sa_col, sb_row, ua_col, ub_row)

    return jnp.sum(partials)


if __name__ == "__main__":
    # Small deterministic example.  Shapes are deliberately NOT multiples of
    # the tile sizes to exercise the padding paths; small block sizes give the
    # (Di, Dj, N) grid several steps per axis.
    key = jax.random.PRNGKey(0)
    ka, kb = jax.random.split(key)
    N, D = 50, 200
    z_a = jax.random.normal(ka, (N, D), dtype=jnp.float32)
    z_b = jax.random.normal(kb, (N, D), dtype=jnp.float32)

    fn = jax.jit(functools.partial(barlow_twins_loss, block_n=16, block_d=128))
    loss = fn(z_a, z_b)
    jax.block_until_ready(loss)

    # Pure-JAX reference (same math, outside Pallas, full f32).
    def _ref(za, zb, lam=0.005):
        za_n = (za - za.mean(0)) / za.std(0, ddof=1)
        zb_n = (zb - zb.mean(0)) / zb.std(0, ddof=1)
        n, d = za.shape
        c = (za_n.T @ zb_n) / n
        eye = jnp.eye(d, dtype=jnp.float32)
        c_diff = (c - eye) ** 2
        c_diff = jnp.where(eye > 0, c_diff, c_diff * lam)
        return c_diff.sum()

    ref = _ref(z_a, z_b)
    # Tolerance accounts for the bf16 streaming of the MXU operands.
    assert jnp.allclose(loss, ref, rtol=5e-3, atol=1e-3), (loss, ref)
    print("KERNEL_OK")
</pallas_src>

<mosaic_0001>
module attributes {stable_mosaic.version = 11 : i64} {
  func.func @_stats_kernel(%arg0: i32, %arg1: i32, %arg2: memref<16x128xbf16, #tpu.memory_space<vmem>>, %arg3: memref<16x128xbf16, #tpu.memory_space<vmem>>, %arg4: memref<8x128xf32, #tpu.memory_space<vmem>>, %arg5: memref<8x128xf32, #tpu.memory_space<vmem>>, %arg6: memref<8x128xf32, #tpu.memory_space<vmem>>, %arg7: memref<8x128xf32, #tpu.memory_space<vmem>>) attributes {dimension_semantics = [#tpu.dimension_semantics<parallel>, #tpu.dimension_semantics<arbitrary>], iteration_bounds = array<i64: 2, 4>, scalar_prefetch = 0 : i64, scratch_operands = 0 : i64, tpu.core_type = #tpu.core_type<tc>, window_params = [{transform_indices = @transform_0, window_bounds = array<i64: 16, 128>}, {transform_indices = @transform_1, window_bounds = array<i64: 16, 128>}, {transform_indices = @transform_2, window_bounds = array<i64: 8, 128>}, {transform_indices = @transform_3, window_bounds = array<i64: 8, 128>}, {transform_indices = @transform_4, window_bounds = array<i64: 8, 128>}, {transform_indices = @transform_5, window_bounds = array<i64: 8, 128>}]} {
    %c0_i32 = arith.constant 0 : i32
    %0 = arith.cmpi eq, %arg1, %c0_i32 : i32
    %1 = arith.extui %0 : i1 to i32
    %c0_i32_0 = arith.constant 0 : i32
    %2 = arith.cmpi ne, %1, %c0_i32_0 : i32
    scf.if %2 {
      %cst_23 = arith.constant 0.000000e+00 : f32
      %27 = vector.broadcast %cst_23 : f32 to vector<8x128xf32>
      %c0_24 = arith.constant 0 : index
      %c0_25 = arith.constant 0 : index
      %28 = vector.load %arg4[%c0_24, %c0_25] : memref<8x128xf32, #tpu.memory_space<vmem>>, vector<8x128xf32>
      tpu.vector_store %arg4[%c0_24, %c0_25], %27 {strides = array<i32>} : memref<8x128xf32, #tpu.memory_space<vmem>>, vector<8x128xf32>,
      %cst_26 = arith.constant 0.000000e+00 : f32
      %29 = vector.broadcast %cst_26 : f32 to vector<8x128xf32>
      %c0_27 = arith.constant 0 : index
      %c0_28 = arith.constant 0 : index
      %30 = vector.load %arg5[%c0_27, %c0_28] : memref<8x128xf32, #tpu.memory_space<vmem>>, vector<8x128xf32>
      tpu.vector_store %arg5[%c0_27, %c0_28], %29 {strides = array<i32>} : memref<8x128xf32, #tpu.memory_space<vmem>>, vector<8x128xf32>,
      %cst_29 = arith.constant 0.000000e+00 : f32
      %31 = vector.broadcast %cst_29 : f32 to vector<8x128xf32>
      %c0_30 = arith.constant 0 : index
      %c0_31 = arith.constant 0 : index
      %32 = vector.load %arg6[%c0_30, %c0_31] : memref<8x128xf32, #tpu.memory_space<vmem>>, vector<8x128xf32>
      tpu.vector_store %arg6[%c0_30, %c0_31], %31 {strides = array<i32>} : memref<8x128xf32, #tpu.memory_space<vmem>>, vector<8x128xf32>,
      %cst_32 = arith.constant 0.000000e+00 : f32
      %33 = vector.broadcast %cst_32 : f32 to vector<8x128xf32>
      %c0_33 = arith.constant 0 : index
      %c0_34 = arith.constant 0 : index
      %34 = vector.load %arg7[%c0_33, %c0_34] : memref<8x128xf32, #tpu.memory_space<vmem>>, vector<8x128xf32>
      tpu.vector_store %arg7[%c0_33, %c0_34], %33 {strides = array<i32>} : memref<8x128xf32, #tpu.memory_space<vmem>>, vector<8x128xf32>,
    } else {
    }
    %c0 = arith.constant 0 : index
    %c0_1 = arith.constant 0 : index
    %3 = vector.load %arg2[%c0, %c0_1] : memref<16x128xbf16, #tpu.memory_space<vmem>>, vector<16x128xbf16>
    %4 = arith.extf %3 : vector<16x128xbf16> to vector<16x128xf32>
    %5 = vector.shape_cast %4 : vector<16x128xf32> to vector<2x8x128xf32>
    %c0_2 = arith.constant 0 : index
    %c0_3 = arith.constant 0 : index
    %6 = vector.load %arg3[%c0_2, %c0_3] : memref<16x128xbf16, #tpu.memory_space<vmem>>, vector<16x128xbf16>
    %7 = arith.extf %6 : vector<16x128xbf16> to vector<16x128xf32>
    %8 = vector.shape_cast %7 : vector<16x128xf32> to vector<2x8x128xf32>
    %c0_4 = arith.constant 0 : index
    %c0_5 = arith.constant 0 : index
    %9 = vector.load %arg4[%c0_4, %c0_5] : memref<8x128xf32, #tpu.memory_space<vmem>>, vector<8x128xf32>
    %cst = arith.constant dense<0.000000e+00> : vector<8x128xf32>
    %10 = vector.multi_reduction <add>, %5, %cst [0] : vector<2x8x128xf32> to vector<8x128xf32>
    %11 = arith.addf %9, %10 : vector<8x128xf32>
    %c0_6 = arith.constant 0 : index
    %c0_7 = arith.constant 0 : index
    %12 = vector.load %arg4[%c0_6, %c0_7] : memref<8x128xf32, #tpu.memory_space<vmem>>, vector<8x128xf32>
    tpu.vector_store %arg4[%c0_6, %c0_7], %11 {strides = array<i32>} : memref<8x128xf32, #tpu.memory_space<vmem>>, vector<8x128xf32>,
    %c0_8 = arith.constant 0 : index
    %c0_9 = arith.constant 0 : index
    %13 = vector.load %arg5[%c0_8, %c0_9] : memref<8x128xf32, #tpu.memory_space<vmem>>, vector<8x128xf32>
    %14 = arith.mulf %5, %5 : vector<2x8x128xf32>
    %cst_10 = arith.constant dense<0.000000e+00> : vector<8x128xf32>
    %15 = vector.multi_reduction <add>, %14, %cst_10 [0] : vector<2x8x128xf32> to vector<8x128xf32>
    %16 = arith.addf %13, %15 : vector<8x128xf32>
    %c0_11 = arith.constant 0 : index
    %c0_12 = arith.constant 0 : index
    %17 = vector.load %arg5[%c0_11, %c0_12] : memref<8x128xf32, #tpu.memory_space<vmem>>, vector<8x128xf32>
    tpu.vector_store %arg5[%c0_11, %c0_12], %16 {strides = array<i32>} : memref<8x128xf32, #tpu.memory_space<vmem>>, vector<8x128xf32>,
    %c0_13 = arith.constant 0 : index
    %c0_14 = arith.constant 0 : index
    %18 = vector.load %arg6[%c0_13, %c0_14] : memref<8x128xf32, #tpu.memory_space<vmem>>, vector<8x128xf32>
    %cst_15 = arith.constant dense<0.000000e+00> : vector<8x128xf32>
    %19 = vector.multi_reduction <add>, %8, %cst_15 [0] : vector<2x8x128xf32> to vector<8x128xf32>
    %20 = arith.addf %18, %19 : vector<8x128xf32>
    %c0_16 = arith.constant 0 : index
    %c0_17 = arith.constant 0 : index
    %21 = vector.load %arg6[%c0_16, %c0_17] : memref<8x128xf32, #tpu.memory_space<vmem>>, vector<8x128xf32>
    tpu.vector_store %arg6[%c0_16, %c0_17], %20 {strides = array<i32>} : memref<8x128xf32, #tpu.memory_space<vmem>>, vector<8x128xf32>,
    %c0_18 = arith.constant 0 : index
    %c0_19 = arith.constant 0 : index
    %22 = vector.load %arg7[%c0_18, %c0_19] : memref<8x128xf32, #tpu.memory_space<vmem>>, vector<8x128xf32>
    %23 = arith.mulf %8, %8 : vector<2x8x128xf32>
    %cst_20 = arith.constant dense<0.000000e+00> : vector<8x128xf32>
    %24 = vector.multi_reduction <add>, %23, %cst_20 [0] : vector<2x8x128xf32> to vector<8x128xf32>
    %25 = arith.addf %22, %24 : vector<8x128xf32>
    %c0_21 = arith.constant 0 : index
    %c0_22 = arith.constant 0 : index
    %26 = vector.load %arg7[%c0_21, %c0_22] : memref<8x128xf32, #tpu.memory_space<vmem>>, vector<8x128xf32>
    tpu.vector_store %arg7[%c0_21, %c0_22], %25 {strides = array<i32>} : memref<8x128xf32, #tpu.memory_space<vmem>>, vector<8x128xf32>,
    return
  }
  func.func @transform_0(%arg0: i32, %arg1: i32) -> (i32, i32) {
    %c0_i32 = arith.constant 0 : i32
    return %arg1, %arg0 : i32, i32
  }
  func.func @transform_1(%arg0: i32, %arg1: i32) -> (i32, i32) {
    %c0_i32 = arith.constant 0 : i32
    return %arg1, %arg0 : i32, i32
  }
  func.func @transform_2(%arg0: i32, %arg1: i32) -> (i32, i32) {
    %c0_i32 = arith.constant 0 : i32
    %c0_i32_0 = arith.constant 0 : i32
    return %c0_i32, %arg0 : i32, i32
  }
  func.func @transform_3(%arg0: i32, %arg1: i32) -> (i32, i32) {
    %c0_i32 = arith.constant 0 : i32
    %c0_i32_0 = arith.constant 0 : i32
    return %c0_i32, %arg0 : i32, i32
  }
  func.func @transform_4(%arg0: i32, %arg1: i32) -> (i32, i32) {
    %c0_i32 = arith.constant 0 : i32
    %c0_i32_0 = arith.constant 0 : i32
    return %c0_i32, %arg0 : i32, i32
  }
  func.func @transform_5(%arg0: i32, %arg1: i32) -> (i32, i32) {
    %c0_i32 = arith.constant 0 : i32
    %c0_i32_0 = arith.constant 0 : i32
    return %c0_i32, %arg0 : i32, i32
  }
}

module attributes {stable_mosaic.version = 11 : i64} {
  func.func @_cross_corr_kernel(%arg0: i32, %arg1: i32, %arg2: i32, %arg3: memref<16x128xbf16, #tpu.memory_space<vmem>>, %arg4: memref<16x128xbf16, #tpu.memory_space<vmem>>, %arg5: memref<128x1xf32, #tpu.memory_space<vmem>>, %arg6: memref<1x128xf32, #tpu.memory_space<vmem>>, %arg7: memref<128x1xf32, #tpu.memory_space<vmem>>, %arg8: memref<1x128xf32, #tpu.memory_space<vmem>>, %arg9: memref<8x128xf32, #tpu.memory_space<vmem>>, %arg10: memref<128x128xf32, #tpu.memory_space<vmem>>) attributes {dimension_semantics = [#tpu.dimension_semantics<parallel>, #tpu.dimension_semantics<parallel>, #tpu.dimension_semantics<arbitrary>], iteration_bounds = array<i64: 2, 2, 4>, scalar_prefetch = 0 : i64, scratch_operands = 1 : i64, tpu.core_type = #tpu.core_type<tc>, window_params = [{transform_indices = @transform_0, window_bounds = array<i64: 16, 128>}, {transform_indices = @transform_1, window_bounds = array<i64: 16, 128>}, {transform_indices = @transform_2, window_bounds = array<i64: 128, 1>}, {transform_indices = @transform_3, window_bounds = array<i64: 1, 128>}, {transform_indices = @transform_4, window_bounds = array<i64: 128, 1>}, {transform_indices = @transform_5, window_bounds = array<i64: 1, 128>}, {transform_indices = @transform_6, window_bounds = array<i64: 8, 128>}]} {
    %c0_i32 = arith.constant 0 : i32
    %0 = arith.cmpi eq, %arg2, %c0_i32 : i32
    %1 = arith.extui %0 : i1 to i32
    %c0_i32_0 = arith.constant 0 : i32
    %2 = arith.cmpi ne, %1, %c0_i32_0 : i32
    scf.if %2 {
      %cst_9 = arith.constant 0.000000e+00 : f32
      %12 = vector.broadcast %cst_9 : f32 to vector<128x128xf32>
      %c0_10 = arith.constant 0 : index
      %c0_11 = arith.constant 0 : index
      %13 = vector.load %arg10[%c0_10, %c0_11] : memref<128x128xf32, #tpu.memory_space<vmem>>, vector<128x128xf32>
      tpu.vector_store %arg10[%c0_10, %c0_11], %12 {strides = array<i32>} : memref<128x128xf32, #tpu.memory_space<vmem>>, vector<128x128xf32>,
      %cst_12 = arith.constant 0.000000e+00 : f32
      %14 = vector.broadcast %cst_12 : f32 to vector<8x128xf32>
      %c0_13 = arith.constant 0 : index
      %c0_14 = arith.constant 0 : index
      %15 = vector.load %arg9[%c0_13, %c0_14] : memref<8x128xf32, #tpu.memory_space<vmem>>, vector<8x128xf32>
      tpu.vector_store %arg9[%c0_13, %c0_14], %14 {strides = array<i32>} : memref<8x128xf32, #tpu.memory_space<vmem>>, vector<8x128xf32>,
    } else {
    }
    %c0 = arith.constant 0 : index
    %c0_1 = arith.constant 0 : index
    %3 = vector.load %arg10[%c0, %c0_1] : memref<128x128xf32, #tpu.memory_space<vmem>>, vector<128x128xf32>
    %c0_2 = arith.constant 0 : index
    %c0_3 = arith.constant 0 : index
    %4 = vector.load %arg3[%c0_2, %c0_3] : memref<16x128xbf16, #tpu.memory_space<vmem>>, vector<16x128xbf16>
    %c0_4 = arith.constant 0 : index
    %c0_5 = arith.constant 0 : index
    %5 = vector.load %arg4[%c0_4, %c0_5] : memref<16x128xbf16, #tpu.memory_space<vmem>>, vector<16x128xbf16>
    %cst = arith.constant dense<0.000000e+00> : vector<128x128xf32>
    %6 = tpu.matmul %4, %5, %cst {dimension_numbers = #tpu.dot_dimension_numbers<[0], [0], [1], [1], [0, 1, 1, 1], [], []>} : vector<16x128xbf16>, vector<16x128xbf16>, vector<128x128xf32> -> vector<128x128xf32>
    %7 = arith.addf %3, %6 : vector<128x128xf32>
    %c0_6 = arith.constant 0 : index
    %c0_7 = arith.constant 0 : index
    %8 = vector.load %arg10[%c0_6, %c0_7] : memref<128x128xf32, #tpu.memory_space<vmem>>, vector<128x128xf32>
    tpu.vector_store %arg10[%c0_6, %c0_7], %7 {strides = array<i32>} : memref<128x128xf32, #tpu.memory_space<vmem>>, vector<128x128xf32>,
    %c3_i32 = arith.constant 3 : i32
    %9 = arith.cmpi eq, %arg2, %c3_i32 : i32
    %10 = arith.extui %9 : i1 to i32
    %c0_i32_8 = arith.constant 0 : i32
    %11 = arith.cmpi ne, %10, %c0_i32_8 : i32
    scf.if %11 {
      %c0_9 = arith.constant 0 : index
      %c0_10 = arith.constant 0 : index
      %12 = vector.load %arg10[%c0_9, %c0_10] : memref<128x128xf32, #tpu.memory_space<vmem>>, vector<128x128xf32>
      %c0_11 = arith.constant 0 : index
      %c0_12 = arith.constant 0 : index
      %13 = vector.load %arg5[%c0_11, %c0_12] : memref<128x1xf32, #tpu.memory_space<vmem>>, vector<128x1xf32>
      %14 = vector.broadcast %13 : vector<128x1xf32> to vector<128x128xf32>
      %15 = arith.mulf %12, %14 : vector<128x128xf32>
      %c0_13 = arith.constant 0 : index
      %c0_14 = arith.constant 0 : index
      %16 = vector.load %arg6[%c0_13, %c0_14] : memref<1x128xf32, #tpu.memory_space<vmem>>, vector<1x128xf32>
      %17 = vector.broadcast %16 : vector<1x128xf32> to vector<128x128xf32>
      %18 = arith.mulf %15, %17 : vector<128x128xf32>
      %c0_15 = arith.constant 0 : index
      %c0_16 = arith.constant 0 : index
      %19 = vector.load %arg7[%c0_15, %c0_16] : memref<128x1xf32, #tpu.memory_space<vmem>>, vector<128x1xf32>
      %c0_17 = arith.constant 0 : index
      %c0_18 = arith.constant 0 : index
      %20 = vector.load %arg8[%c0_17, %c0_18] : memref<1x128xf32, #tpu.memory_space<vmem>>, vector<1x128xf32>
      %21 = vector.broadcast %19 : vector<128x1xf32> to vector<128x128xf32>
      %22 = vector.broadcast %20 : vector<1x128xf32> to vector<128x128xf32>
      %23 = arith.mulf %21, %22 : vector<128x128xf32>
      %24 = arith.subf %18, %23 : vector<128x128xf32>
      %25 = tpu.iota {dimensions = array<i32: 0>} : vector<128x128xi32>
      %c128_i32 = arith.constant 128 : i32
      %26 = arith.muli %arg0, %c128_i32 : i32
      %27 = vector.broadcast %26 : i32 to vector<128x128xi32>
      %28 = arith.addi %25, %27 : vector<128x128xi32>
      %29 = tpu.iota {dimensions = array<i32: 1>} : vector<128x128xi32>
      %c128_i32_19 = arith.constant 128 : i32
      %30 = arith.muli %arg1, %c128_i32_19 : i32
      %31 = vector.broadcast %30 : i32 to vector<128x128xi32>
      %32 = arith.addi %29, %31 : vector<128x128xi32>
      %33 = arith.cmpi eq, %28, %32 : vector<128x128xi32>
      %c200_i32 = arith.constant 200 : i32
      %34 = vector.broadcast %c200_i32 : i32 to vector<128x128xi32>
      %35 = arith.cmpi slt, %28, %34 : vector<128x128xi32>
      %36 = arith.andi %33, %35 : vector<128x128xi1>
      %cst_20 = arith.constant 1.000000e+00 : f32
      %37 = vector.broadcast %cst_20 : f32 to vector<128x128xf32>
      %38 = arith.subf %24, %37 : vector<128x128xf32>
      %39 = arith.mulf %38, %38 : vector<128x128xf32>
      %40 = arith.mulf %24, %24 : vector<128x128xf32>
      %cst_21 = arith.constant 5.000000e-03 : f32
      %41 = vector.broadcast %cst_21 : f32 to vector<128x128xf32>
      %42 = arith.mulf %41, %40 : vector<128x128xf32>
      %43 = arith.select %36, %39, %42 : vector<128x128xi1>, vector<128x128xf32>
      %44 = vector.shape_cast %43 : vector<128x128xf32> to vector<1x128x128xf32>
      %cst_22 = arith.constant dense<0.000000e+00> : vector<1xf32>
      %45 = vector.multi_reduction <add>, %44, %cst_22 [1, 2] : vector<1x128x128xf32> to vector<1xf32>
      %46 = vector.shape_cast %45 : vector<1xf32> to vector<1x1x1xf32>
      %47 = vector.extract %46[0, 0, 0] : f32 from vector<1x1x1xf32>
      %48 = tpu.iota {dimensions = array<i32: 0>} : vector<8x128xi32>
      %49 = tpu.iota {dimensions = array<i32: 1>} : vector<8x128xi32>
      %c0_i32_23 = arith.constant 0 : i32
      %50 = vector.broadcast %c0_i32_23 : i32 to vector<8x128xi32>
      %51 = arith.cmpi eq, %48, %50 : vector<8x128xi32>
      %c0_i32_24 = arith.constant 0 : i32
      %52 = vector.broadcast %c0_i32_24 : i32 to vector<8x128xi32>
      %53 = arith.cmpi eq, %49, %52 : vector<8x128xi32>
      %54 = arith.andi %51, %53 : vector<8x128xi1>
      %cst_25 = arith.constant 0.000000e+00 : f32
      %55 = vector.broadcast %47 : f32 to vector<8x128xf32>
      %56 = vector.broadcast %cst_25 : f32 to vector<8x128xf32>
      %57 = arith.select %54, %55, %56 : vector<8x128xi1>, vector<8x128xf32>
      %c0_26 = arith.constant 0 : index
      %c0_27 = arith.constant 0 : index
      %58 = vector.load %arg9[%c0_26, %c0_27] : memref<8x128xf32, #tpu.memory_space<vmem>>, vector<8x128xf32>
      tpu.vector_store %arg9[%c0_26, %c0_27], %57 {strides = array<i32>} : memref<8x128xf32, #tpu.memory_space<vmem>>, vector<8x128xf32>,
    } else {
    }
    return
  }
  func.func @transform_0(%arg0: i32, %arg1: i32, %arg2: i32) -> (i32, i32) {
    %c0_i32 = arith.constant 0 : i32
    return %arg2, %arg0 : i32, i32
  }
  func.func @transform_1(%arg0: i32, %arg1: i32, %arg2: i32) -> (i32, i32) {
    %c0_i32 = arith.constant 0 : i32
    return %arg2, %arg1 : i32, i32
  }
  func.func @transform_2(%arg0: i32, %arg1: i32, %arg2: i32) -> (i32, i32) {
    %c0_i32 = arith.constant 0 : i32
    %c0_i32_0 = arith.constant 0 : i32
    return %arg0, %c0_i32 : i32, i32
  }
  func.func @transform_3(%arg0: i32, %arg1: i32, %arg2: i32) -> (i32, i32) {
    %c0_i32 = arith.constant 0 : i32
    %c0_i32_0 = arith.constant 0 : i32
    return %c0_i32, %arg1 : i32, i32
  }
  func.func @transform_4(%arg0: i32, %arg1: i32, %arg2: i32) -> (i32, i32) {
    %c0_i32 = arith.constant 0 : i32
    %c0_i32_0 = arith.constant 0 : i32
    return %arg0, %c0_i32 : i32, i32
  }
  func.func @transform_5(%arg0: i32, %arg1: i32, %arg2: i32) -> (i32, i32) {
    %c0_i32 = arith.constant 0 : i32
    %c0_i32_0 = arith.constant 0 : i32
    return %c0_i32, %arg1 : i32, i32
  }
  func.func @transform_6(%arg0: i32, %arg1: i32, %arg2: i32) -> (i32, i32) {
    %c0_i32 = arith.constant 0 : i32
    return %arg0, %arg1 : i32, i32
  }
}

</mosaic_0001>

<llo_original>
// kernel: barlow_twins_loss.2
$region0: #{barlow_twins_loss.2}
  #allocation0 [shape = 'u32[]', space=smem, size = 0x4, offset = 0x4, fixed_abs, tag = 'smem constant byte address 0x4 - core index']
  #allocation1 [shape = 'u32[72,128]{1,0:T(1,128)}', space=vmem, size = 0x9000, scoped, tag = 'internal scratch']
  %s0 = inlined_call_operand.vmem [shape: bf16[64,256], index: 0, kind: input, shape index: {}]
  %s1 = inlined_call_operand.vmem [shape: bf16[64,256], index: 1, kind: input, shape index: {}]
  %s2 = inlined_call_operand.vmem [shape: f32[8,256], index: 2, kind: output, shape index: {0}]
  %s3 = inlined_call_operand.vmem [shape: f32[8,256], index: 3, kind: output, shape index: {1}]
  %s4 = inlined_call_operand.vmem [shape: f32[8,256], index: 4, kind: output, shape index: {2}]
  %s5 = inlined_call_operand.vmem [shape: f32[8,256], index: 5, kind: output, shape index: {3}]
  %6 = xla_tuple %s2, %s3, %s4, %s5
  %s7 = sld [smem:[#allocation0]]
  $region151: #{barlow_twins_loss.2} parent=0
    _
  %s9 = ssub.s32 1, %s7
  %s10 = scalar_select 0, %s9, %s7
  $region1: #{barlow_twins_loss.2} parent=0
    #allocation2 [shape = 'u8[8192]{0}', space=vmem, size = 0x2000, scoped, tag = 'input window, operand 0']
    #allocation3 [shape = 'u8[8192]{0}', space=vmem, size = 0x2000, scoped, tag = 'input window, operand 1']
    loop: start=0, step=1, limit=10
    $region2: #{barlow_twins_loss.2} parent=1 // loop_pre_header
      _
    $region3: #{barlow_twins_loss.2} parent=1 // loop_header
      %s12 = sphi 0, %s16
      %p13 = scmp.ge.s32.totalorder %s12, 10
      %s19 = sphi 0, %s31
      %s20 = sphi 0, %s27
      %s21 = sphi 0, %s19
      %s22 = sphi 0, %s20
      %s23 = sphi 0, %s21
      %s24 = sphi 0, %s22
      %s36 = sphi 0, %s38
      %s39 = sphi 0, %s36
      %s40 = sphi 0, %s39
      %s56 = sphi 0, %s40
      %s64 = sphi 0, %s66
      %s67 = sphi 0, %s64
      %s68 = sphi 0, %s67
      %s84 = sphi 0, %s68
      %s90 = sphi 0, %s92
      %s93 = sphi 0, %s90
      %s94 = sphi 0, %s93
      %s110 = sphi 0, %s94
      %s116 = sphi 0, %s118
      %s119 = sphi 0, %s116
      %s120 = sphi 0, %s119
      %s136 = sphi 0, %s120
      %s142 = sphi 0, %s144
      %s145 = sphi 0, %s142
      %s146 = sphi 0, %s145
      %s162 = sphi 0, %s146
      %s168 = sphi 0, %s170
      %s171 = sphi 0, %s168
      %s172 = sphi 0, %s171
      %s188 = sphi 0, %s172
    $region4: #{barlow_twins_loss.2} parent=1 // loop_header_branch
      %15 = sbr.rel (%p13) target = $region8
    $region5: #{barlow_twins_loss.2} parent=1 // loop_body
      %s17 = ssub.s32 %s12, 1
      %s18 = ssub.s32 %s12, 2
      %s25 = sadd.s32 1, %s20
      %p26 = scmp.ge.s32.totalorder %s25, 4
      %s27 = scalar_select %p26, 0, %s25
      %s28 = sadd.s32 1, %s19
      %s29 = scalar_select %p26, %s28, %s19
      %p30 = scmp.ge.s32.totalorder %s29, 2
      %s31 = scalar_select %p30, 0, %s29
      %s32 = ssub.s32 %s20, %s27
      %s33 = ssub.s32 %s19, %s31
      %s34 = sor.u32 %s32, %s33
      %p35 = scmp.eq.s32.totalorder %s34, 0
      %s37 = sadd.s32 %s36, 1
      %s38 = scalar_select %p35, %s36, %s37
      %p41 = pneg %p35
      %p42 = scmp.eq.s32.totalorder %s12, 7
      %p43 = por %p41, %p42
      %p44 = scmp.ne.s32.totalorder %s36, %s39
      %p45 = scmp.eq.s32.totalorder %s12, 0
      %p46 = por %p44, %p45
      %p47 = scmp.ne.s32.totalorder %s36, %s39
      %p48 = scmp.eq.s32.totalorder %s17, 7
      %p49 = por %p47, %p48
      %p50 = scmp.ne.s32.totalorder %s39, %s40
      %p51 = scmp.eq.s32.totalorder %s17, 0
      %p52 = por %p50, %p51
      %p53 = scmp.ne.s32.totalorder %s39, %s40
      %p54 = scmp.eq.s32.totalorder %s18, 7
      %p55 = por %p53, %p54
      %p57 = scmp.ne.s32.totalorder %s40, %s56
      %p58 = scmp.eq.s32.totalorder %s18, 0
      %p59 = por %p57, %p58
      %s60 = ssub.s32 %s20, %s27
      %s61 = ssub.s32 %s19, %s31
      %s62 = sor.u32 %s60, %s61
      %p63 = scmp.eq.s32.totalorder %s62, 0
      %s65 = sadd.s32 %s64, 1
      %s66 = scalar_select %p63, %s64, %s65
      %p69 = pneg %p63
      %p70 = scmp.eq.s32.totalorder %s12, 7
      %p71 = por %p69, %p70
      %p72 = scmp.ne.s32.totalorder %s64, %s67
      %p73 = scmp.eq.s32.totalorder %s12, 0
      %p74 = por %p72, %p73
      %p75 = scmp.ne.s32.totalorder %s64, %s67
      %p76 = scmp.eq.s32.totalorder %s17, 7
      %p77 = por %p75, %p76
      %p78 = scmp.ne.s32.totalorder %s67, %s68
      %p79 = scmp.eq.s32.totalorder %s17, 0
      %p80 = por %p78, %p79
      %p81 = scmp.ne.s32.totalorder %s67, %s68
      %p82 = scmp.eq.s32.totalorder %s18, 7
      %p83 = por %p81, %p82
      %p85 = scmp.ne.s32.totalorder %s68, %s84
      %p86 = scmp.eq.s32.totalorder %s18, 0
      %p87 = por %p85, %p86
      %s88 = ssub.s32 %s19, %s31
      %p89 = scmp.eq.s32.totalorder %s88, 0
      %s91 = sadd.s32 %s90, 1
      %s92 = scalar_select %p89, %s90, %s91
      %p95 = pneg %p89
      %p96 = scmp.eq.s32.totalorder %s12, 7
      %p97 = por %p95, %p96
      %p98 = scmp.ne.s32.totalorder %s90, %s93
      %p99 = scmp.eq.s32.totalorder %s12, 0
      %p100 = por %p98, %p99
      %p101 = scmp.ne.s32.totalorder %s90, %s93
      %p102 = scmp.eq.s32.totalorder %s17, 7
      %p103 = por %p101, %p102
      %p104 = scmp.ne.s32.totalorder %s93, %s94
      %p105 = scmp.eq.s32.totalorder %s17, 0
      %p106 = por %p104, %p105
      %p107 = scmp.ne.s32.totalorder %s93, %s94
      %p108 = scmp.eq.s32.totalorder %s18, 7
      %p109 = por %p107, %p108
      %p111 = scmp.ne.s32.totalorder %s94, %s110
      %p112 = scmp.eq.s32.totalorder %s18, 0
      %p113 = por %p111, %p112
      %s114 = ssub.s32 %s19, %s31
      %p115 = scmp.eq.s32.totalorder %s114, 0
      %s117 = sadd.s32 %s116, 1
      %s118 = scalar_select %p115, %s116, %s117
      %p121 = pneg %p115
      %p122 = scmp.eq.s32.totalorder %s12, 7
      %p123 = por %p121, %p122
      %p124 = scmp.ne.s32.totalorder %s116, %s119
      %p125 = scmp.eq.s32.totalorder %s12, 0
      %p126 = por %p124, %p125
      %p127 = scmp.ne.s32.totalorder %s116, %s119
      %p128 = scmp.eq.s32.totalorder %s17, 7
      %p129 = por %p127, %p128
      %p130 = scmp.ne.s32.totalorder %s119, %s120
      %p131 = scmp.eq.s32.totalorder %s17, 0
      %p132 = por %p130, %p131
      %p133 = scmp.ne.s32.totalorder %s119, %s120
      %p134 = scmp.eq.s32.totalorder %s18, 7
      %p135 = por %p133, %p134
      %p137 = scmp.ne.s32.totalorder %s120, %s136
      %p138 = scmp.eq.s32.totalorder %s18, 0
      %p139 = por %p137, %p138
      %s140 = ssub.s32 %s19, %s31
      %p141 = scmp.eq.s32.totalorder %s140, 0
      %s143 = sadd.s32 %s142, 1
      %s144 = scalar_select %p141, %s142, %s143
      %p147 = pneg %p141
      %p148 = scmp.eq.s32.totalorder %s12, 7
      %p149 = por %p147, %p148
      %p150 = scmp.ne.s32.totalorder %s142, %s145
      %p151 = scmp.eq.s32.totalorder %s12, 0
      %p152 = por %p150, %p151
      %p153 = scmp.ne.s32.totalorder %s142, %s145
      %p154 = scmp.eq.s32.totalorder %s17, 7
      %p155 = por %p153, %p154
      %p156 = scmp.ne.s32.totalorder %s145, %s146
      %p157 = scmp.eq.s32.totalorder %s17, 0
      %p158 = por %p156, %p157
      %p159 = scmp.ne.s32.totalorder %s145, %s146
      %p160 = scmp.eq.s32.totalorder %s18, 7
      %p161 = por %p159, %p160
      %p163 = scmp.ne.s32.totalorder %s146, %s162
      %p164 = scmp.eq.s32.totalorder %s18, 0
      %p165 = por %p163, %p164
      %s166 = ssub.s32 %s19, %s31
      %p167 = scmp.eq.s32.totalorder %s166, 0
      %s169 = sadd.s32 %s168, 1
      %s170 = scalar_select %p167, %s168, %s169
      %p173 = pneg %p167
      %p174 = scmp.eq.s32.totalorder %s12, 7
      %p175 = por %p173, %p174
      %p176 = scmp.ne.s32.totalorder %s168, %s171
      %p177 = scmp.eq.s32.totalorder %s12, 0
      %p178 = por %p176, %p177
      %p179 = scmp.ne.s32.totalorder %s168, %s171
      %p180 = scmp.eq.s32.totalorder %s17, 7
      %p181 = por %p179, %p180
      %p182 = scmp.ne.s32.totalorder %s171, %s172
      %p183 = scmp.eq.s32.totalorder %s17, 0
      %p184 = por %p182, %p183
      %p185 = scmp.ne.s32.totalorder %s171, %s172
      %p186 = scmp.eq.s32.totalorder %s18, 7
      %p187 = por %p185, %p186
      %p189 = scmp.ne.s32.totalorder %s172, %s188
      %p190 = scmp.eq.s32.totalorder %s18, 0
      %p191 = por %p189, %p190
      %p192 = scmp.le.s32.totalorder 1, %s12
      %p193 = scmp.lt.s32.totalorder %s12, 9
      %p194 = pnand %p192, %p193
      %p195 = pneg %p194
      // Predicated region
      $region9: #{barlow_twins_loss.2} parent=5 // pred_check
        _
      $region10: #{barlow_twins_loss.2} parent=5 // pred_check_branch
        %197 = sbr.rel (%p194) target = $region12
      $region11: #{barlow_twins_loss.2} parent=5 // pred_region
        %s198 = ssub.s32 %s12, 1
      $region12: #{barlow_twins_loss.2} parent=5 // pred_fallthru
        _
      %p199 = scmp.lt.s32.totalorder %s12, 8
      // Predicated region
      $region13: #{barlow_twins_loss.2} parent=5 // pred_check
        %p200 = pneg %p199
      $region14: #{barlow_twins_loss.2} parent=5 // pred_check_branch
        %202 = sbr.rel (%p200) target = $region16
      $region15: #{barlow_twins_loss.2} parent=5 // pred_region
        // Predicated region
        $region17: #{barlow_twins_loss.2} parent=15 // pred_check
          %p203 = pneg %p46
        $region18: #{barlow_twins_loss.2} parent=15 // pred_check_branch
          %205 = sbr.rel (%p203) target = $region20
        $region19: #{barlow_twins_loss.2} parent=15 // pred_region
          %s206 = sand.u32 %s36, 1
          %s207 = sand.u32 %s36, 1
          %s208 = smul.addr %s207, 8
          %s209 = scalar_lea.vmem [#allocation2], %s208
          %s210 = smul.u32 2, %s20
          %s211 = smul.addr %s210, 2
          %s212 = sadd.s32 %s19, %s211
          %s213 = smul.addr %s212, 4
          %s214 = scalar_lea.vmem %s0, %s213
          // Predicated region
          $region21: #{barlow_twins_loss.2} parent=19 // pred_check
            _
          $region22: #{barlow_twins_loss.2} parent=19 // pred_check_branch
            %216 = sbr.rel (0) target = $region24
          $region23: #{barlow_twins_loss.2} parent=19 // pred_region
            // Predicated region
            $region25: #{barlow_twins_loss.2} parent=23 // pred_check
              _
            $region26: #{barlow_twins_loss.2} parent=23 // pred_check_branch
              %218 = sbr.rel target = $region28
            $region27: #{barlow_twins_loss.2} parent=23 // pred_region
              // Predicated region
              $region40: #{barlow_twins_loss.2} parent=27 // pred_check
                _
              $region41: #{barlow_twins_loss.2} parent=27 // pred_check_branch
                %236 = sbr.rel (0) target = $region43
              $region42: #{barlow_twins_loss.2} parent=27 // pred_region
                loop: start=0, step=1, limit=1
                $region44: #{barlow_twins_loss.2} parent=42 // loop_pre_header
                  _
                $region45: #{barlow_twins_loss.2} parent=42 // loop_header
                  %s238 = sphi 0, %s242
                  %p239 = scmp.ge.s32.totalorder %s238, 1
                  %s243 = sphi %s214, %s214
                  %s244 = sphi %s209, %s209
                $region46: #{barlow_twins_loss.2} parent=42 // loop_header_branch
                  %241 = sbr.rel (%p239) target = $region50
                $region47: #{barlow_twins_loss.2} parent=42 // loop_body
                  _
                $region48: #{barlow_twins_loss.2} parent=42 // loop_footer
                  %s242 = sadd.s32 1, %s238
                $region49: #{barlow_twins_loss.2} parent=42 // loop_footer_branch
                  %237 = sbr.rel target = $region45
                $region50: #{barlow_twins_loss.2} parent=42 // loop_exit
                  _
                %s246 = ssub.s32 16, 1
                loop: start=0, step=1, limit=1
                $region51: #{barlow_twins_loss.2} parent=42 // loop_pre_header
                  _
                $region52: #{barlow_twins_loss.2} parent=42 // loop_header
                  %s248 = sphi 0, %s252
                  %p249 = scmp.ge.s32.totalorder %s248, 1
                  %s253 = sphi %s214, %s214
                  %s254 = sphi %s209, %s209
                $region53: #{barlow_twins_loss.2} parent=42 // loop_header_branch
                  %251 = sbr.rel (%p249) target = $region57
                $region54: #{barlow_twins_loss.2} parent=42 // loop_body
                  %v255 = vld [vmem:[%s253] sm:%s246]
                  %256 = vst [vmem:[%s254] sm:%s246] %v255
                  %v257 = vld [vmem:[%s253 + $0x8] sm:%s246]
                  %258 = vst [vmem:[%s254 + $0x4] sm:%s246] %v257
                $region55: #{barlow_twins_loss.2} parent=42 // loop_footer
                  %s252 = sadd.s32 1, %s248
                $region56: #{barlow_twins_loss.2} parent=42 // loop_footer_branch
                  %247 = sbr.rel target = $region52
                $region57: #{barlow_twins_loss.2} parent=42 // loop_exit
                  _
              $region43: #{barlow_twins_loss.2} parent=27 // pred_fallthru
                _
            $region28: #{barlow_twins_loss.2} parent=23 // pred_fallthru
              _
            // Predicated region
            $region29: #{barlow_twins_loss.2} parent=23 // pred_check
              _
            $region30: #{barlow_twins_loss.2} parent=23 // pred_check_branch
              %220 = sbr.rel (0) target = $region32
            $region31: #{barlow_twins_loss.2} parent=23 // pred_region
              %s222 = ssub.s32 16, 1
              loop: start=0, step=1, limit=1
              $region33: #{barlow_twins_loss.2} parent=31 // loop_pre_header
                _
              $region34: #{barlow_twins_loss.2} parent=31 // loop_header
                %s224 = sphi 0, %s228
                %p225 = scmp.ge.s32.totalorder %s224, 1
                %s229 = sphi %s214, %s214
                %s230 = sphi %s209, %s209
              $region35: #{barlow_twins_loss.2} parent=31 // loop_header_branch
                %227 = sbr.rel (%p225) target = $region39
              $region36: #{barlow_twins_loss.2} parent=31 // loop_body
                %v231 = vld [vmem:[%s229] sm:%s222]
                %232 = vst [vmem:[%s230] sm:%s222] %v231
                %v233 = vld [vmem:[%s229 + $0x8] sm:%s222]
                %234 = vst [vmem:[%s230 + $0x4] sm:%s222] %v233
              $region37: #{barlow_twins_loss.2} parent=31 // loop_footer
                %s228 = sadd.s32 1, %s224
              $region38: #{barlow_twins_loss.2} parent=31 // loop_footer_branch
                %223 = sbr.rel target = $region34
              $region39: #{barlow_twins_loss.2} parent=31 // loop_exit
                _
            $region32: #{barlow_twins_loss.2} parent=23 // pred_fallthru
              _
          $region24: #{barlow_twins_loss.2} parent=19 // pred_fallthru
            _
          %259 = vnop
        $region20: #{barlow_twins_loss.2} parent=15 // pred_fallthru
          _
        // Predicated region
        $region58: #{barlow_twins_loss.2} parent=15 // pred_check
          %p260 = pneg %p74
        $region59: #{barlow_twins_loss.2} parent=15 // pred_check_branch
          %262 = sbr.rel (%p260) target = $region61
        $region60: #{barlow_twins_loss.2} parent=15 // pred_region
          %s263 = sand.u32 %s64, 1
          %s264 = sand.u32 %s64, 1
          %s265 = smul.addr %s264, 8
          %s266 = scalar_lea.vmem [#allocation3], %s265
          %s267 = smul.u32 2, %s20
          %s268 = smul.addr %s267, 2
          %s269 = sadd.s32 %s19, %s268
          %s270 = smul.addr %s269, 4
          %s271 = scalar_lea.vmem %s1, %s270
          // Predicated region
          $region62: #{barlow_twins_loss.2} parent=60 // pred_check
            _
          $region63: #{barlow_twins_loss.2} parent=60 // pred_check_branch
            %273 = sbr.rel (0) target = $region65
          $region64: #{barlow_twins_loss.2} parent=60 // pred_region
            // Predicated region
            $region66: #{barlow_twins_loss.2} parent=64 // pred_check
              _
            $region67: #{barlow_twins_loss.2} parent=64 // pred_check_branch
              %275 = sbr.rel target = $region69
            $region68: #{barlow_twins_loss.2} parent=64 // pred_region
              // Predicated region
              $region81: #{barlow_twins_loss.2} parent=68 // pred_check
                _
              $region82: #{barlow_twins_loss.2} parent=68 // pred_check_branch
                %293 = sbr.rel (0) target = $region84
              $region83: #{barlow_twins_loss.2} parent=68 // pred_region
                loop: start=0, step=1, limit=1
                $region85: #{barlow_twins_loss.2} parent=83 // loop_pre_header
                  _
                $region86: #{barlow_twins_loss.2} parent=83 // loop_header
                  %s295 = sphi 0, %s299
                  %p296 = scmp.ge.s32.totalorder %s295, 1
                  %s300 = sphi %s271, %s271
                  %s301 = sphi %s266, %s266
                $region87: #{barlow_twins_loss.2} parent=83 // loop_header_branch
                  %298 = sbr.rel (%p296) target = $region91
                $region88: #{barlow_twins_loss.2} parent=83 // loop_body
                  _
                $region89: #{barlow_twins_loss.2} parent=83 // loop_footer
                  %s299 = sadd.s32 1, %s295
                $region90: #{barlow_twins_loss.2} parent=83 // loop_footer_branch
                  %294 = sbr.rel target = $region86
                $region91: #{barlow_twins_loss.2} parent=83 // loop_exit
                  _
                %s303 = ssub.s32 16, 1
                loop: start=0, step=1, limit=1
                $region92: #{barlow_twins_loss.2} parent=83 // loop_pre_header
                  _
                $region93: #{barlow_twins_loss.2} parent=83 // loop_header
                  %s305 = sphi 0, %s309
                  %p306 = scmp.ge.s32.totalorder %s305, 1
                  %s310 = sphi %s271, %s271
                  %s311 = sphi %s266, %s266
                $region94: #{barlow_twins_loss.2} parent=83 // loop_header_branch
                  %308 = sbr.rel (%p306) target = $region98
                $region95: #{barlow_twins_loss.2} parent=83 // loop_body
                  %v312 = vld [vmem:[%s310] sm:%s303]
                  %313 = vst [vmem:[%s311] sm:%s303] %v312
                  %v314 = vld [vmem:[%s310 + $0x8] sm:%s303]
                  %315 = vst [vmem:[%s311 + $0x4] sm:%s303] %v314
                $region96: #{barlow_twins_loss.2} parent=83 // loop_footer
                  %s309 = sadd.s32 1, %s305
                $region97: #{barlow_twins_loss.2} parent=83 // loop_footer_branch
                  %304 = sbr.rel target = $region93
                $region98: #{barlow_twins_loss.2} parent=83 // loop_exit
                  _
              $region84: #{barlow_twins_loss.2} parent=68 // pred_fallthru
                _
            $region69: #{barlow_twins_loss.2} parent=64 // pred_fallthru
              _
            // Predicated region
            $region70: #{barlow_twins_loss.2} parent=64 // pred_check
              _
            $region71: #{barlow_twins_loss.2} parent=64 // pred_check_branch
              %277 = sbr.rel (0) target = $region73
            $region72: #{barlow_twins_loss.2} parent=64 // pred_region
              %s279 = ssub.s32 16, 1
              loop: start=0, step=1, limit=1
              $region74: #{barlow_twins_loss.2} parent=72 // loop_pre_header
                _
              $region75: #{barlow_twins_loss.2} parent=72 // loop_header
                %s281 = sphi 0, %s285
                %p282 = scmp.ge.s32.totalorder %s281, 1
                %s286 = sphi %s271, %s271
                %s287 = sphi %s266, %s266
              $region76: #{barlow_twins_loss.2} parent=72 // loop_header_branch
                %284 = sbr.rel (%p282) target = $region80
              $region77: #{barlow_twins_loss.2} parent=72 // loop_body
                %v288 = vld [vmem:[%s286] sm:%s279]
                %289 = vst [vmem:[%s287] sm:%s279] %v288
                %v290 = vld [vmem:[%s286 + $0x8] sm:%s279]
                %291 = vst [vmem:[%s287 + $0x4] sm:%s279] %v290
              $region78: #{barlow_twins_loss.2} parent=72 // loop_footer
                %s285 = sadd.s32 1, %s281
              $region79: #{barlow_twins_loss.2} parent=72 // loop_footer_branch
                %280 = sbr.rel target = $region75
              $region80: #{barlow_twins_loss.2} parent=72 // loop_exit
                _
            $region73: #{barlow_twins_loss.2} parent=64 // pred_fallthru
              _
          $region65: #{barlow_twins_loss.2} parent=60 // pred_fallthru
            _
          %316 = vnop
        $region61: #{barlow_twins_loss.2} parent=15 // pred_fallthru
          _
      $region16: #{barlow_twins_loss.2} parent=5 // pred_fallthru
        _
      %p317 = scmp.le.s32.totalorder 1, %s12
      %p318 = scmp.lt.s32.totalorder %s12, 9
      %p319 = pnand %p317, %p318
      %p320 = pneg %p319
      // Predicated region
      $region99: #{barlow_twins_loss.2} parent=5 // pred_check
        _
      $region100: #{barlow_twins_loss.2} parent=5 // pred_check_branch
        %322 = sbr.rel (%p319) target = $region102
      $region101: #{barlow_twins_loss.2} parent=5 // pred_region
        %s323 = ssub.s32 %s12, 1
        %s324 = sand.u32 %s39, 1
        %s325 = sand.u32 %s39, 1
        %s326 = smul.addr %s325, 8
        %s327 = scalar_lea.vmem [#allocation2], %s326
        // Predicated region
        $region103: #{barlow_twins_loss.2} parent=101 // pred_check
          %p328 = pneg %p52
        $region104: #{barlow_twins_loss.2} parent=101 // pred_check_branch
          %330 = sbr.rel (%p328) target = $region106
        $region105: #{barlow_twins_loss.2} parent=101 // pred_region
          _
        $region106: #{barlow_twins_loss.2} parent=101 // pred_fallthru
          _
        %s331 = sand.u32 %s67, 1
        %s332 = sand.u32 %s67, 1
        %s333 = smul.addr %s332, 8
        %s334 = scalar_lea.vmem [#allocation3], %s333
        // Predicated region
        $region107: #{barlow_twins_loss.2} parent=101 // pred_check
          %p335 = pneg %p80
        $region108: #{barlow_twins_loss.2} parent=101 // pred_check_branch
          %337 = sbr.rel (%p335) target = $region110
        $region109: #{barlow_twins_loss.2} parent=101 // pred_region
          _
        $region110: #{barlow_twins_loss.2} parent=101 // pred_fallthru
          _
        %s338 = sand.u32 %s39, 1
        %s339 = sand.u32 %s39, 1
        %s340 = smul.addr %s339, 8
        %s341 = scalar_lea.vmem [#allocation2], %s340
        %p342 = pneg %p52
        %p343 = pneg %p49
        %s344 = sand.u32 %s67, 1
        %s345 = sand.u32 %s67, 1
        %s346 = smul.addr %s345, 8
        %s347 = scalar_lea.vmem [#allocation3], %s346
        %p348 = pneg %p80
        %p349 = pneg %p77
        %p350 = pneg %p106
        %p351 = pneg %p103
        %p352 = scmp.lt.s32.totalorder %s21, 1
        %s353 = scalar_select %p352, %s21, 1
        %s354 = smul.addr %s353, 8
        %s355 = scalar_lea.vmem %s2, %s354
        %p356 = pneg %p132
        %p357 = pneg %p129
        %p358 = scmp.lt.s32.totalorder %s21, 1
        %s359 = scalar_select %p358, %s21, 1
        %s360 = smul.addr %s359, 8
        %s361 = scalar_lea.vmem %s3, %s360
        %p362 = pneg %p158
        %p363 = pneg %p155
        %p364 = scmp.lt.s32.totalorder %s21, 1
        %s365 = scalar_select %p364, %s21, 1
        %s366 = smul.addr %s365, 8
        %s367 = scalar_lea.vmem %s4, %s366
        %p368 = pneg %p184
        %p369 = pneg %p181
        %p370 = scmp.lt.s32.totalorder %s21, 1
        %s371 = scalar_select %p370, %s21, 1
        %s372 = smul.addr %s371, 8
        %s373 = scalar_lea.vmem %s5, %s372
        %s374 = smul.u32 2, %s22
        %s375 = smul.u32 2, %s22
        %p376 = scmp.lt.s32.totalorder %s21, 1
        %s377 = scalar_select %p376, %s21, 1
        %s378 = smul.addr %s377, 8
        %s379 = scalar_lea.vmem %s2, %s378
        %p380 = scmp.lt.s32.totalorder %s21, 1
        %s381 = scalar_select %p380, %s21, 1
        %s382 = smul.addr %s381, 8
        %s383 = scalar_lea.vmem %s3, %s382
        %p384 = scmp.lt.s32.totalorder %s21, 1
        %s385 = scalar_select %p384, %s21, 1
        %s386 = smul.addr %s385, 8
        %s387 = scalar_lea.vmem %s4, %s386
        %p388 = scmp.lt.s32.totalorder %s21, 1
        %s389 = scalar_select %p388, %s21, 1
        %s390 = smul.addr %s389, 8
        %s391 = scalar_lea.vmem %s5, %s390
        %p392 = scmp.eq.s32.totalorder %s22, 0
        // Predicated region
        $region111: #{barlow_twins_loss.2} parent=101 // pred_check
          %p393 = pneg %p392
        $region112: #{barlow_twins_loss.2} parent=101 // pred_check_branch
          %395 = sbr.rel (%p393) target = $region114
        $region113: #{barlow_twins_loss.2} parent=101 // pred_region
          %396 = vst [vmem:[%s379] sm:$0xff] 0.0
          %397 = vst [vmem:[%s383] sm:$0xff] 0.0
          %398 = vst [vmem:[%s387] sm:$0xff] 0.0
          %399 = vst [vmem:[%s391] sm:$0xff] 0.0
        $region114: #{barlow_twins_loss.2} parent=101 // pred_fallthru
          _
        %v400 = vld [vmem:[%s327] sm:$0xf]
        %v401 = vld [vmem:[%s327 + $0x4] sm:$0xf]
        %v402 = vunpack.c.l.bf16 %v400
        %v403 = vunpack.c.l.bf16 %v401
        %v404 = vld [vmem:[%s334] sm:$0xf]
        %v405 = vld [vmem:[%s334 + $0x4] sm:$0xf]
        %v406 = vunpack.c.l.bf16 %v404
        %v407 = vunpack.c.l.bf16 %v405
        %v408 = vld [vmem:[%s379] sm:$0xff]
        %v409 = vadd.f32 %v402, %v403
        %v410 = vadd.f32 %v408, %v409
        %411 = vst [vmem:[%s379] sm:$0xff] %v410
        %v412 = vld [vmem:[%s383] sm:$0xff]
        %v413 = vmul.f32 %v402, %v402
        %v414 = vmul.f32 %v403, %v403
        %v415 = vadd.f32 %v413, %v414
        %v416 = vadd.f32 %v412, %v415
        %417 = vst [vmem:[%s383] sm:$0xff] %v416
        %v418 = vld [vmem:[%s387] sm:$0xff]
        %v419 = vadd.f32 %v406, %v407
        %v420 = vadd.f32 %v418, %v419
        %421 = vst [vmem:[%s387] sm:$0xff] %v420
        %v422 = vld [vmem:[%s391] sm:$0xff]
        %v423 = vmul.f32 %v406, %v406
        %v424 = vmul.f32 %v407, %v407
        %v425 = vadd.f32 %v423, %v424
        %v426 = vadd.f32 %v422, %v425
        %427 = vst [vmem:[%s391] sm:$0xff] %v426
        %p428 = scmp.lt.s32.totalorder %s21, 1
        %s429 = scalar_select %p428, %s21, 1
        %s430 = smul.addr %s429, 8
        %s431 = scalar_lea.vmem %s2, %s430
        %p432 = scmp.lt.s32.totalorder %s21, 1
        %s433 = scalar_select %p432, %s21, 1
        %s434 = smul.addr %s433, 8
        %s435 = scalar_lea.vmem %s3, %s434
        %p436 = scmp.lt.s32.totalorder %s21, 1
        %s437 = scalar_select %p436, %s21, 1
        %s438 = smul.addr %s437, 8
        %s439 = scalar_lea.vmem %s4, %s438
        %p440 = scmp.lt.s32.totalorder %s21, 1
        %s441 = scalar_select %p440, %s21, 1
        %s442 = smul.addr %s441, 8
        %s443 = scalar_lea.vmem %s5, %s442
        // Predicated region
        $region115: #{barlow_twins_loss.2} parent=101 // pred_check
          %p444 = pneg %p103
        $region116: #{barlow_twins_loss.2} parent=101 // pred_check_branch
          %446 = sbr.rel (%p444) target = $region118
        $region117: #{barlow_twins_loss.2} parent=101 // pred_region
          _
        $region118: #{barlow_twins_loss.2} parent=101 // pred_fallthru
          _
        // Predicated region
        $region119: #{barlow_twins_loss.2} parent=101 // pred_check
          %p447 = pneg %p129
        $region120: #{barlow_twins_loss.2} parent=101 // pred_check_branch
          %449 = sbr.rel (%p447) target = $region122
        $region121: #{barlow_twins_loss.2} parent=101 // pred_region
          _
        $region122: #{barlow_twins_loss.2} parent=101 // pred_fallthru
          _
        // Predicated region
        $region123: #{barlow_twins_loss.2} parent=101 // pred_check
          %p450 = pneg %p155
        $region124: #{barlow_twins_loss.2} parent=101 // pred_check_branch
          %452 = sbr.rel (%p450) target = $region126
        $region125: #{barlow_twins_loss.2} parent=101 // pred_region
          _
        $region126: #{barlow_twins_loss.2} parent=101 // pred_fallthru
          _
        // Predicated region
        $region127: #{barlow_twins_loss.2} parent=101 // pred_check
          %p453 = pneg %p181
        $region128: #{barlow_twins_loss.2} parent=101 // pred_check_branch
          %455 = sbr.rel (%p453) target = $region130
        $region129: #{barlow_twins_loss.2} parent=101 // pred_region
          _
        $region130: #{barlow_twins_loss.2} parent=101 // pred_fallthru
          _
      $region102: #{barlow_twins_loss.2} parent=5 // pred_fallthru
        _
      %p456 = scmp.le.s32.totalorder 2, %s12
      // Predicated region
      $region131: #{barlow_twins_loss.2} parent=5 // pred_check
        %p457 = pneg %p456
      $region132: #{barlow_twins_loss.2} parent=5 // pred_check_branch
        %459 = sbr.rel (%p457) target = $region134
      $region133: #{barlow_twins_loss.2} parent=5 // pred_region
        %s460 = ssub.s32 %s12, 2
        // Predicated region
        $region135: #{barlow_twins_loss.2} parent=133 // pred_check
          %p461 = pneg %p109
        $region136: #{barlow_twins_loss.2} parent=133 // pred_check_branch
          %463 = sbr.rel (%p461) target = $region138
        $region137: #{barlow_twins_loss.2} parent=133 // pred_region
          %p464 = scmp.lt.s32.totalorder %s23, 1
          %s465 = scalar_select %p464, %s23, 1
          %s466 = smul.addr %s465, 8
          %s467 = scalar_lea.vmem %s2, %s466
        $region138: #{barlow_twins_loss.2} parent=133 // pred_fallthru
          _
        // Predicated region
        $region139: #{barlow_twins_loss.2} parent=133 // pred_check
          %p468 = pneg %p135
        $region140: #{barlow_twins_loss.2} parent=133 // pred_check_branch
          %470 = sbr.rel (%p468) target = $region142
        $region141: #{barlow_twins_loss.2} parent=133 // pred_region
          %p471 = scmp.lt.s32.totalorder %s23, 1
          %s472 = scalar_select %p471, %s23, 1
          %s473 = smul.addr %s472, 8
          %s474 = scalar_lea.vmem %s3, %s473
        $region142: #{barlow_twins_loss.2} parent=133 // pred_fallthru
          _
        // Predicated region
        $region143: #{barlow_twins_loss.2} parent=133 // pred_check
          %p475 = pneg %p161
        $region144: #{barlow_twins_loss.2} parent=133 // pred_check_branch
          %477 = sbr.rel (%p475) target = $region146
        $region145: #{barlow_twins_loss.2} parent=133 // pred_region
          %p478 = scmp.lt.s32.totalorder %s23, 1
          %s479 = scalar_select %p478, %s23, 1
          %s480 = smul.addr %s479, 8
          %s481 = scalar_lea.vmem %s4, %s480
        $region146: #{barlow_twins_loss.2} parent=133 // pred_fallthru
          _
        // Predicated region
        $region147: #{barlow_twins_loss.2} parent=133 // pred_check
          %p482 = pneg %p187
        $region148: #{barlow_twins_loss.2} parent=133 // pred_check_branch
          %484 = sbr.rel (%p482) target = $region150
        $region149: #{barlow_twins_loss.2} parent=133 // pred_region
          %p485 = scmp.lt.s32.totalorder %s23, 1
          %s486 = scalar_select %p485, %s23, 1
          %s487 = smul.addr %s486, 8
          %s488 = scalar_lea.vmem %s5, %s487
        $region150: #{barlow_twins_loss.2} parent=133 // pred_fallthru
          _
      $region134: #{barlow_twins_loss.2} parent=5 // pred_fallthru
        _
    $region6: #{barlow_twins_loss.2} parent=1 // loop_footer
      %s16 = sadd.s32 1, %s12
    $region7: #{barlow_twins_loss.2} parent=1 // loop_footer_branch
      %11 = sbr.rel target = $region3
    $region8: #{barlow_twins_loss.2} parent=1 // loop_exit
      _

// kernel: barlow_twins_loss.3
$region0: #{barlow_twins_loss.3}
  #allocation0 [shape = 'u32[]', space=smem, size = 0x4, offset = 0x4, fixed_abs, tag = 'smem constant byte address 0x4 - core index']
  #allocation1 [shape = 'u32[72,128]{1,0:T(1,128)}', space=vmem, size = 0x9000, scoped, tag = 'internal scratch']
  #allocation2 [shape = 'f32[128,128]{1,0:T(8,128)}', space=vmem, size = 0x10000, scoped, tag = 'scratch operand']
  %s0 = inlined_call_operand.vmem [shape: bf16[64,256], index: 0, kind: input, shape index: {}]
  %s1 = inlined_call_operand.vmem [shape: bf16[64,256], index: 1, kind: input, shape index: {}]
  %s2 = inlined_call_operand.vmem [shape: f32[256,1], index: 2, kind: input, shape index: {}]
  %s3 = inlined_call_operand.vmem [shape: f32[1,256], index: 3, kind: input, shape index: {}]
  %s4 = inlined_call_operand.vmem [shape: f32[256,1], index: 4, kind: input, shape index: {}]
  %s5 = inlined_call_operand.vmem [shape: f32[1,256], index: 5, kind: input, shape index: {}]
  %s6 = inlined_call_operand.vmem [shape: f32[16,256], index: 6, kind: output, shape index: {}]
  %s7 = sld [smem:[#allocation0]]
  $region147: #{barlow_twins_loss.3} parent=0
    _
  %s9 = ssub.s32 1, %s7
  %s10 = scalar_select 0, %s9, %s7
  $region1: #{barlow_twins_loss.3} parent=0
    #allocation3 [shape = 'u8[8192]{0}', space=vmem, size = 0x2000, scoped, tag = 'input window, operand 0']
    #allocation4 [shape = 'u8[8192]{0}', space=vmem, size = 0x2000, scoped, tag = 'input window, operand 1']
    loop: start=0, step=1, limit=18
    $region2: #{barlow_twins_loss.3} parent=1 // loop_pre_header
      _
    $region3: #{barlow_twins_loss.3} parent=1 // loop_header
      %s12 = sphi 0, %s16
      %p13 = scmp.ge.s32.totalorder %s12, 18
      %s19 = sphi 0, %s38
      %s20 = sphi 0, %s34
      %s21 = sphi 0, %s30
      %s22 = sphi 0, %s19
      %s23 = sphi 0, %s20
      %s24 = sphi 0, %s21
      %s25 = sphi 0, %s22
      %s26 = sphi 0, %s23
      %s27 = sphi 0, %s24
      %s43 = sphi 0, %s45
      %s46 = sphi 0, %s43
      %s47 = sphi 0, %s46
      %s63 = sphi 0, %s47
      %s71 = sphi 0, %s73
      %s74 = sphi 0, %s71
      %s75 = sphi 0, %s74
      %s91 = sphi 0, %s75
      %s97 = sphi 0, %s99
      %s100 = sphi 0, %s97
      %s101 = sphi 0, %s100
      %s117 = sphi 0, %s101
      %s123 = sphi 0, %s125
      %s126 = sphi 0, %s123
      %s127 = sphi 0, %s126
      %s143 = sphi 0, %s127
      %s149 = sphi 0, %s151
      %s152 = sphi 0, %s149
      %s153 = sphi 0, %s152
      %s169 = sphi 0, %s153
      %s175 = sphi 0, %s177
      %s178 = sphi 0, %s175
      %s179 = sphi 0, %s178
      %s195 = sphi 0, %s179
      %s203 = sphi 0, %s205
      %s206 = sphi 0, %s203
      %s207 = sphi 0, %s206
      %s223 = sphi 0, %s207
    $region4: #{barlow_twins_loss.3} parent=1 // loop_header_branch
      %15 = sbr.rel (%p13) target = $region8
    $region5: #{barlow_twins_loss.3} parent=1 // loop_body
      %s17 = ssub.s32 %s12, 1
      %s18 = ssub.s32 %s12, 2
      %s28 = sadd.s32 1, %s21
      %p29 = scmp.ge.s32.totalorder %s28, 4
      %s30 = scalar_select %p29, 0, %s28
      %s31 = sadd.s32 1, %s20
      %s32 = scalar_select %p29, %s31, %s20
      %p33 = scmp.ge.s32.totalorder %s32, 2
      %s34 = scalar_select %p33, 0, %s32
      %s35 = sadd.s32 1, %s19
      %s36 = scalar_select %p33, %s35, %s19
      %p37 = scmp.ge.s32.totalorder %s36, 2
      %s38 = scalar_select %p37, 0, %s36
      %s39 = ssub.s32 %s21, %s30
      %s40 = ssub.s32 %s19, %s38
      %s41 = sor.u32 %s39, %s40
      %p42 = scmp.eq.s32.totalorder %s41, 0
      %s44 = sadd.s32 %s43, 1
      %s45 = scalar_select %p42, %s43, %s44
      %p48 = pneg %p42
      %p49 = scmp.eq.s32.totalorder %s12, 15
      %p50 = por %p48, %p49
      %p51 = scmp.ne.s32.totalorder %s43, %s46
      %p52 = scmp.eq.s32.totalorder %s12, 0
      %p53 = por %p51, %p52
      %p54 = scmp.ne.s32.totalorder %s43, %s46
      %p55 = scmp.eq.s32.totalorder %s17, 15
      %p56 = por %p54, %p55
      %p57 = scmp.ne.s32.totalorder %s46, %s47
      %p58 = scmp.eq.s32.totalorder %s17, 0
      %p59 = por %p57, %p58
      %p60 = scmp.ne.s32.totalorder %s46, %s47
      %p61 = scmp.eq.s32.totalorder %s18, 15
      %p62 = por %p60, %p61
      %p64 = scmp.ne.s32.totalorder %s47, %s63
      %p65 = scmp.eq.s32.totalorder %s18, 0
      %p66 = por %p64, %p65
      %s67 = ssub.s32 %s21, %s30
      %s68 = ssub.s32 %s20, %s34
      %s69 = sor.u32 %s67, %s68
      %p70 = scmp.eq.s32.totalorder %s69, 0
      %s72 = sadd.s32 %s71, 1
      %s73 = scalar_select %p70, %s71, %s72
      %p76 = pneg %p70
      %p77 = scmp.eq.s32.totalorder %s12, 15
      %p78 = por %p76, %p77
      %p79 = scmp.ne.s32.totalorder %s71, %s74
      %p80 = scmp.eq.s32.totalorder %s12, 0
      %p81 = por %p79, %p80
      %p82 = scmp.ne.s32.totalorder %s71, %s74
      %p83 = scmp.eq.s32.totalorder %s17, 15
      %p84 = por %p82, %p83
      %p85 = scmp.ne.s32.totalorder %s74, %s75
      %p86 = scmp.eq.s32.totalorder %s17, 0
      %p87 = por %p85, %p86
      %p88 = scmp.ne.s32.totalorder %s74, %s75
      %p89 = scmp.eq.s32.totalorder %s18, 15
      %p90 = por %p88, %p89
      %p92 = scmp.ne.s32.totalorder %s75, %s91
      %p93 = scmp.eq.s32.totalorder %s18, 0
      %p94 = por %p92, %p93
      %s95 = ssub.s32 %s19, %s38
      %p96 = scmp.eq.s32.totalorder %s95, 0
      %s98 = sadd.s32 %s97, 1
      %s99 = scalar_select %p96, %s97, %s98
      %p102 = pneg %p96
      %p103 = scmp.eq.s32.totalorder %s12, 15
      %p104 = por %p102, %p103
      %p105 = scmp.ne.s32.totalorder %s97, %s100
      %p106 = scmp.eq.s32.totalorder %s12, 0
      %p107 = por %p105, %p106
      %p108 = scmp.ne.s32.totalorder %s97, %s100
      %p109 = scmp.eq.s32.totalorder %s17, 15
      %p110 = por %p108, %p109
      %p111 = scmp.ne.s32.totalorder %s100, %s101
      %p112 = scmp.eq.s32.totalorder %s17, 0
      %p113 = por %p111, %p112
      %p114 = scmp.ne.s32.totalorder %s100, %s101
      %p115 = scmp.eq.s32.totalorder %s18, 15
      %p116 = por %p114, %p115
      %p118 = scmp.ne.s32.totalorder %s101, %s117
      %p119 = scmp.eq.s32.totalorder %s18, 0
      %p120 = por %p118, %p119
      %s121 = ssub.s32 %s20, %s34
      %p122 = scmp.eq.s32.totalorder %s121, 0
      %s124 = sadd.s32 %s123, 1
      %s125 = scalar_select %p122, %s123, %s124
      %p128 = pneg %p122
      %p129 = scmp.eq.s32.totalorder %s12, 15
      %p130 = por %p128, %p129
      %p131 = scmp.ne.s32.totalorder %s123, %s126
      %p132 = scmp.eq.s32.totalorder %s12, 0
      %p133 = por %p131, %p132
      %p134 = scmp.ne.s32.totalorder %s123, %s126
      %p135 = scmp.eq.s32.totalorder %s17, 15
      %p136 = por %p134, %p135
      %p137 = scmp.ne.s32.totalorder %s126, %s127
      %p138 = scmp.eq.s32.totalorder %s17, 0
      %p139 = por %p137, %p138
      %p140 = scmp.ne.s32.totalorder %s126, %s127
      %p141 = scmp.eq.s32.totalorder %s18, 15
      %p142 = por %p140, %p141
      %p144 = scmp.ne.s32.totalorder %s127, %s143
      %p145 = scmp.eq.s32.totalorder %s18, 0
      %p146 = por %p144, %p145
      %s147 = ssub.s32 %s19, %s38
      %p148 = scmp.eq.s32.totalorder %s147, 0
      %s150 = sadd.s32 %s149, 1
      %s151 = scalar_select %p148, %s149, %s150
      %p154 = pneg %p148
      %p155 = scmp.eq.s32.totalorder %s12, 15
      %p156 = por %p154, %p155
      %p157 = scmp.ne.s32.totalorder %s149, %s152
      %p158 = scmp.eq.s32.totalorder %s12, 0
      %p159 = por %p157, %p158
      %p160 = scmp.ne.s32.totalorder %s149, %s152
      %p161 = scmp.eq.s32.totalorder %s17, 15
      %p162 = por %p160, %p161
      %p163 = scmp.ne.s32.totalorder %s152, %s153
      %p164 = scmp.eq.s32.totalorder %s17, 0
      %p165 = por %p163, %p164
      %p166 = scmp.ne.s32.totalorder %s152, %s153
      %p167 = scmp.eq.s32.totalorder %s18, 15
      %p168 = por %p166, %p167
      %p170 = scmp.ne.s32.totalorder %s153, %s169
      %p171 = scmp.eq.s32.totalorder %s18, 0
      %p172 = por %p170, %p171
      %s173 = ssub.s32 %s20, %s34
      %p174 = scmp.eq.s32.totalorder %s173, 0
      %s176 = sadd.s32 %s175, 1
      %s177 = scalar_select %p174, %s175, %s176
      %p180 = pneg %p174
      %p181 = scmp.eq.s32.totalorder %s12, 15
      %p182 = por %p180, %p181
      %p183 = scmp.ne.s32.totalorder %s175, %s178
      %p184 = scmp.eq.s32.totalorder %s12, 0
      %p185 = por %p183, %p184
      %p186 = scmp.ne.s32.totalorder %s175, %s178
      %p187 = scmp.eq.s32.totalorder %s17, 15
      %p188 = por %p186, %p187
      %p189 = scmp.ne.s32.totalorder %s178, %s179
      %p190 = scmp.eq.s32.totalorder %s17, 0
      %p191 = por %p189, %p190
      %p192 = scmp.ne.s32.totalorder %s178, %s179
      %p193 = scmp.eq.s32.totalorder %s18, 15
      %p194 = por %p192, %p193
      %p196 = scmp.ne.s32.totalorder %s179, %s195
      %p197 = scmp.eq.s32.totalorder %s18, 0
      %p198 = por %p196, %p197
      %s199 = ssub.s32 %s19, %s38
      %s200 = ssub.s32 %s20, %s34
      %s201 = sor.u32 %s199, %s200
      %p202 = scmp.eq.s32.totalorder %s201, 0
      %s204 = sadd.s32 %s203, 1
      %s205 = scalar_select %p202, %s203, %s204
      %p208 = pneg %p202
      %p209 = scmp.eq.s32.totalorder %s12, 15
      %p210 = por %p208, %p209
      %p211 = scmp.ne.s32.totalorder %s203, %s206
      %p212 = scmp.eq.s32.totalorder %s12, 0
      %p213 = por %p211, %p212
      %p214 = scmp.ne.s32.totalorder %s203, %s206
      %p215 = scmp.eq.s32.totalorder %s17, 15
      %p216 = por %p214, %p215
      %p217 = scmp.ne.s32.totalorder %s206, %s207
      %p218 = scmp.eq.s32.totalorder %s17, 0
      %p219 = por %p217, %p218
      %p220 = scmp.ne.s32.totalorder %s206, %s207
      %p221 = scmp.eq.s32.totalorder %s18, 15
      %p222 = por %p220, %p221
      %p224 = scmp.ne.s32.totalorder %s207, %s223
      %p225 = scmp.eq.s32.totalorder %s18, 0
      %p226 = por %p224, %p225
      %p227 = scmp.le.s32.totalorder 1, %s12
      %p228 = scmp.lt.s32.totalorder %s12, 17
      %p229 = pnand %p227, %p228
      %p230 = pneg %p229
      // Predicated region
      $region9: #{barlow_twins_loss.3} parent=5 // pred_check
        _
      $region10: #{barlow_twins_loss.3} parent=5 // pred_check_branch
        %232 = sbr.rel (%p229) target = $region12
      $region11: #{barlow_twins_loss.3} parent=5 // pred_region
        %s233 = ssub.s32 %s12, 1
      $region12: #{barlow_twins_loss.3} parent=5 // pred_fallthru
        _
      %p234 = scmp.lt.s32.totalorder %s12, 16
      // Predicated region
      $region13: #{barlow_twins_loss.3} parent=5 // pred_check
        %p235 = pneg %p234
      $region14: #{barlow_twins_loss.3} parent=5 // pred_check_branch
        %237 = sbr.rel (%p235) target = $region16
      $region15: #{barlow_twins_loss.3} parent=5 // pred_region
        // Predicated region
        $region17: #{barlow_twins_loss.3} parent=15 // pred_check
          %p238 = pneg %p53
        $region18: #{barlow_twins_loss.3} parent=15 // pred_check_branch
          %240 = sbr.rel (%p238) target = $region20
        $region19: #{barlow_twins_loss.3} parent=15 // pred_region
          %s241 = sand.u32 %s43, 1
          %s242 = sand.u32 %s43, 1
          %s243 = smul.addr %s242, 8
          %s244 = scalar_lea.vmem [#allocation3], %s243
          %s245 = smul.u32 2, %s21
          %s246 = smul.addr %s245, 2
          %s247 = sadd.s32 %s19, %s246
          %s248 = smul.addr %s247, 4
          %s249 = scalar_lea.vmem %s0, %s248
          // Predicated region
          $region21: #{barlow_twins_loss.3} parent=19 // pred_check
            _
          $region22: #{barlow_twins_loss.3} parent=19 // pred_check_branch
            %251 = sbr.rel (0) target = $region24
          $region23: #{barlow_twins_loss.3} parent=19 // pred_region
            // Predicated region
            $region25: #{barlow_twins_loss.3} parent=23 // pred_check
              _
            $region26: #{barlow_twins_loss.3} parent=23 // pred_check_branch
              %253 = sbr.rel target = $region28
            $region27: #{barlow_twins_loss.3} parent=23 // pred_region
              // Predicated region
              $region40: #{barlow_twins_loss.3} parent=27 // pred_check
                _
              $region41: #{barlow_twins_loss.3} parent=27 // pred_check_branch
                %271 = sbr.rel (0) target = $region43
              $region42: #{barlow_twins_loss.3} parent=27 // pred_region
                loop: start=0, step=1, limit=1
                $region44: #{barlow_twins_loss.3} parent=42 // loop_pre_header
                  _
                $region45: #{barlow_twins_loss.3} parent=42 // loop_header
                  %s273 = sphi 0, %s277
                  %p274 = scmp.ge.s32.totalorder %s273, 1
                  %s278 = sphi %s249, %s249
                  %s279 = sphi %s244, %s244
                $region46: #{barlow_twins_loss.3} parent=42 // loop_header_branch
                  %276 = sbr.rel (%p274) target = $region50
                $region47: #{barlow_twins_loss.3} parent=42 // loop_body
                  _
                $region48: #{barlow_twins_loss.3} parent=42 // loop_footer
                  %s277 = sadd.s32 1, %s273
                $region49: #{barlow_twins_loss.3} parent=42 // loop_footer_branch
                  %272 = sbr.rel target = $region45
                $region50: #{barlow_twins_loss.3} parent=42 // loop_exit
                  _
                %s281 = ssub.s32 16, 1
                loop: start=0, step=1, limit=1
                $region51: #{barlow_twins_loss.3} parent=42 // loop_pre_header
                  _
                $region52: #{barlow_twins_loss.3} parent=42 // loop_header
                  %s283 = sphi 0, %s287
                  %p284 = scmp.ge.s32.totalorder %s283, 1
                  %s288 = sphi %s249, %s249
                  %s289 = sphi %s244, %s244
                $region53: #{barlow_twins_loss.3} parent=42 // loop_header_branch
                  %286 = sbr.rel (%p284) target = $region57
                $region54: #{barlow_twins_loss.3} parent=42 // loop_body
                  %v290 = vld [vmem:[%s288] sm:%s281]
                  %291 = vst [vmem:[%s289] sm:%s281] %v290
                  %v292 = vld [vmem:[%s288 + $0x8] sm:%s281]
                  %293 = vst [vmem:[%s289 + $0x4] sm:%s281] %v292
                $region55: #{barlow_twins_loss.3} parent=42 // loop_footer
                  %s287 = sadd.s32 1, %s283
                $region56: #{barlow_twins_loss.3} parent=42 // loop_footer_branch
                  %282 = sbr.rel target = $region52
                $region57: #{barlow_twins_loss.3} parent=42 // loop_exit
                  _
              $region43: #{barlow_twins_loss.3} parent=27 // pred_fallthru
                _
            $region28: #{barlow_twins_loss.3} parent=23 // pred_fallthru
              _
            // Predicated region
            $region29: #{barlow_twins_loss.3} parent=23 // pred_check
              _
            $region30: #{barlow_twins_loss.3} parent=23 // pred_check_branch
              %255 = sbr.rel (0) target = $region32
            $region31: #{barlow_twins_loss.3} parent=23 // pred_region
              %s257 = ssub.s32 16, 1
              loop: start=0, step=1, limit=1
              $region33: #{barlow_twins_loss.3} parent=31 // loop_pre_header
                _
              $region34: #{barlow_twins_loss.3} parent=31 // loop_header
                %s259 = sphi 0, %s263
                %p260 = scmp.ge.s32.totalorder %s259, 1
                %s264 = sphi %s249, %s249
                %s265 = sphi %s244, %s244
              $region35: #{barlow_twins_loss.3} parent=31 // loop_header_branch
                %262 = sbr.rel (%p260) target = $region39
              $region36: #{barlow_twins_loss.3} parent=31 // loop_body
                %v266 = vld [vmem:[%s264] sm:%s257]
                %267 = vst [vmem:[%s265] sm:%s257] %v266
                %v268 = vld [vmem:[%s264 + $0x8] sm:%s257]
                %269 = vst [vmem:[%s265 + $0x4] sm:%s257] %v268
              $region37: #{barlow_twins_loss.3} parent=31 // loop_footer
                %s263 = sadd.s32 1, %s259
              $region38: #{barlow_twins_loss.3} parent=31 // loop_footer_branch
                %258 = sbr.rel target = $region34
              $region39: #{barlow_twins_loss.3} parent=31 // loop_exit
                _
            $region32: #{barlow_twins_loss.3} parent=23 // pred_fallthru
              _
          $region24: #{barlow_twins_loss.3} parent=19 // pred_fallthru
            _
          %294 = vnop
        $region20: #{barlow_twins_loss.3} parent=15 // pred_fallthru
          _
        // Predicated region
        $region58: #{barlow_twins_loss.3} parent=15 // pred_check
          %p295 = pneg %p81
        $region59: #{barlow_twins_loss.3} parent=15 // pred_check_branch
          %297 = sbr.rel (%p295) target = $region61
        $region60: #{barlow_twins_loss.3} parent=15 // pred_region
          %s298 = sand.u32 %s71, 1
          %s299 = sand.u32 %s71, 1
          %s300 = smul.addr %s299, 8
          %s301 = scalar_lea.vmem [#allocation4], %s300
          %s302 = smul.u32 2, %s21
          %s303 = smul.addr %s302, 2
          %s304 = sadd.s32 %s20, %s303
          %s305 = smul.addr %s304, 4
          %s306 = scalar_lea.vmem %s1, %s305
          // Predicated region
          $region62: #{barlow_twins_loss.3} parent=60 // pred_check
            _
          $region63: #{barlow_twins_loss.3} parent=60 // pred_check_branch
            %308 = sbr.rel (0) target = $region65
          $region64: #{barlow_twins_loss.3} parent=60 // pred_region
            // Predicated region
            $region66: #{barlow_twins_loss.3} parent=64 // pred_check
              _
            $region67: #{barlow_twins_loss.3} parent=64 // pred_check_branch
              %310 = sbr.rel target = $region69
            $region68: #{barlow_twins_loss.3} parent=64 // pred_region
              // Predicated region
              $region81: #{barlow_twins_loss.3} parent=68 // pred_check
                _
              $region82: #{barlow_twins_loss.3} parent=68 // pred_check_branch
                %328 = sbr.rel (0) target = $region84
              $region83: #{barlow_twins_loss.3} parent=68 // pred_region
                loop: start=0, step=1, limit=1
                $region85: #{barlow_twins_loss.3} parent=83 // loop_pre_header
                  _
                $region86: #{barlow_twins_loss.3} parent=83 // loop_header
                  %s330 = sphi 0, %s334
                  %p331 = scmp.ge.s32.totalorder %s330, 1
                  %s335 = sphi %s306, %s306
                  %s336 = sphi %s301, %s301
                $region87: #{barlow_twins_loss.3} parent=83 // loop_header_branch
                  %333 = sbr.rel (%p331) target = $region91
                $region88: #{barlow_twins_loss.3} parent=83 // loop_body
                  _
                $region89: #{barlow_twins_loss.3} parent=83 // loop_footer
                  %s334 = sadd.s32 1, %s330
                $region90: #{barlow_twins_loss.3} parent=83 // loop_footer_branch
                  %329 = sbr.rel target = $region86
                $region91: #{barlow_twins_loss.3} parent=83 // loop_exit
                  _
                %s338 = ssub.s32 16, 1
                loop: start=0, step=1, limit=1
                $region92: #{barlow_twins_loss.3} parent=83 // loop_pre_header
                  _
                $region93: #{barlow_twins_loss.3} parent=83 // loop_header
                  %s340 = sphi 0, %s344
                  %p341 = scmp.ge.s32.totalorder %s340, 1
                  %s345 = sphi %s306, %s306
                  %s346 = sphi %s301, %s301
                $region94: #{barlow_twins_loss.3} parent=83 // loop_header_branch
                  %343 = sbr.rel (%p341) target = $region98
                $region95: #{barlow_twins_loss.3} parent=83 // loop_body
                  %v347 = vld [vmem:[%s345] sm:%s338]
                  %348 = vst [vmem:[%s346] sm:%s338] %v347
                  %v349 = vld [vmem:[%s345 + $0x8] sm:%s338]
                  %350 = vst [vmem:[%s346 + $0x4] sm:%s338] %v349
                $region96: #{barlow_twins_loss.3} parent=83 // loop_footer
                  %s344 = sadd.s32 1, %s340
                $region97: #{barlow_twins_loss.3} parent=83 // loop_footer_branch
                  %339 = sbr.rel target = $region93
                $region98: #{barlow_twins_loss.3} parent=83 // loop_exit
                  _
              $region84: #{barlow_twins_loss.3} parent=68 // pred_fallthru
                _
            $region69: #{barlow_twins_loss.3} parent=64 // pred_fallthru
              _
            // Predicated region
            $region70: #{barlow_twins_loss.3} parent=64 // pred_check
              _
            $region71: #{barlow_twins_loss.3} parent=64 // pred_check_branch
              %312 = sbr.rel (0) target = $region73
            $region72: #{barlow_twins_loss.3} parent=64 // pred_region
              %s314 = ssub.s32 16, 1
              loop: start=0, step=1, limit=1
              $region74: #{barlow_twins_loss.3} parent=72 // loop_pre_header
                _
              $region75: #{barlow_twins_loss.3} parent=72 // loop_header
                %s316 = sphi 0, %s320
                %p317 = scmp.ge.s32.totalorder %s316, 1
                %s321 = sphi %s306, %s306
                %s322 = sphi %s301, %s301
              $region76: #{barlow_twins_loss.3} parent=72 // loop_header_branch
                %319 = sbr.rel (%p317) target = $region80
              $region77: #{barlow_twins_loss.3} parent=72 // loop_body
                %v323 = vld [vmem:[%s321] sm:%s314]
                %324 = vst [vmem:[%s322] sm:%s314] %v323
                %v325 = vld [vmem:[%s321 + $0x8] sm:%s314]
                %326 = vst [vmem:[%s322 + $0x4] sm:%s314] %v325
              $region78: #{barlow_twins_loss.3} parent=72 // loop_footer
                %s320 = sadd.s32 1, %s316
              $region79: #{barlow_twins_loss.3} parent=72 // loop_footer_branch
                %315 = sbr.rel target = $region75
              $region80: #{barlow_twins_loss.3} parent=72 // loop_exit
                _
            $region73: #{barlow_twins_loss.3} parent=64 // pred_fallthru
              _
          $region65: #{barlow_twins_loss.3} parent=60 // pred_fallthru
            _
          %351 = vnop
        $region61: #{barlow_twins_loss.3} parent=15 // pred_fallthru
          _
        // Predicated region
        $region99: #{barlow_twins_loss.3} parent=15 // pred_check
          %p352 = pneg %p107
        $region100: #{barlow_twins_loss.3} parent=15 // pred_check_branch
          %354 = sbr.rel (%p352) target = $region102
        $region101: #{barlow_twins_loss.3} parent=15 // pred_region
          %s355 = smul.u32 16, %s19
          %p356 = scmp.lt.s32.totalorder %s355, 31
          %s357 = scalar_select %p356, %s355, 31
          %s358 = smul.addr %s357, 8
          %s359 = scalar_lea.vmem %s2, %s358
          %s360 = smul.u32 16, %s19
        $region102: #{barlow_twins_loss.3} parent=15 // pred_fallthru
          _
        // Predicated region
        $region103: #{barlow_twins_loss.3} parent=15 // pred_check
          %p361 = pneg %p133
        $region104: #{barlow_twins_loss.3} parent=15 // pred_check_branch
          %363 = sbr.rel (%p361) target = $region106
        $region105: #{barlow_twins_loss.3} parent=15 // pred_region
          %p364 = scmp.lt.s32.totalorder %s20, 1
          %s365 = scalar_select %p364, %s20, 1
          %s366 = scalar_lea.vmem %s3, %s365
        $region106: #{barlow_twins_loss.3} parent=15 // pred_fallthru
          _
        // Predicated region
        $region107: #{barlow_twins_loss.3} parent=15 // pred_check
          %p367 = pneg %p159
        $region108: #{barlow_twins_loss.3} parent=15 // pred_check_branch
          %369 = sbr.rel (%p367) target = $region110
        $region109: #{barlow_twins_loss.3} parent=15 // pred_region
          %s370 = smul.u32 16, %s19
          %p371 = scmp.lt.s32.totalorder %s370, 31
          %s372 = scalar_select %p371, %s370, 31
          %s373 = smul.addr %s372, 8
          %s374 = scalar_lea.vmem %s4, %s373
          %s375 = smul.u32 16, %s19
        $region110: #{barlow_twins_loss.3} parent=15 // pred_fallthru
          _
        // Predicated region
        $region111: #{barlow_twins_loss.3} parent=15 // pred_check
          %p376 = pneg %p185
        $region112: #{barlow_twins_loss.3} parent=15 // pred_check_branch
          %378 = sbr.rel (%p376) target = $region114
        $region113: #{barlow_twins_loss.3} parent=15 // pred_region
          %p379 = scmp.lt.s32.totalorder %s20, 1
          %s380 = scalar_select %p379, %s20, 1
          %s381 = scalar_lea.vmem %s5, %s380
        $region114: #{barlow_twins_loss.3} parent=15 // pred_fallthru
          _
      $region16: #{barlow_twins_loss.3} parent=5 // pred_fallthru
        _
      %p382 = scmp.le.s32.totalorder 1, %s12
      %p383 = scmp.lt.s32.totalorder %s12, 17
      %p384 = pnand %p382, %p383
      %p385 = pneg %p384
      // Predicated region
      $region115: #{barlow_twins_loss.3} parent=5 // pred_check
        _
      $region116: #{barlow_twins_loss.3} parent=5 // pred_check_branch
        %387 = sbr.rel (%p384) target = $region118
      $region117: #{barlow_twins_loss.3} parent=5 // pred_region
        %s388 = ssub.s32 %s12, 1
        %s389 = sand.u32 %s46, 1
        %s390 = sand.u32 %s46, 1
        %s391 = smul.addr %s390, 8
        %s392 = scalar_lea.vmem [#allocation3], %s391
        // Predicated region
        $region119: #{barlow_twins_loss.3} parent=117 // pred_check
          %p393 = pneg %p59
        $region120: #{barlow_twins_loss.3} parent=117 // pred_check_branch
          %395 = sbr.rel (%p393) target = $region122
        $region121: #{barlow_twins_loss.3} parent=117 // pred_region
          _
        $region122: #{barlow_twins_loss.3} parent=117 // pred_fallthru
          _
        %s396 = sand.u32 %s74, 1
        %s397 = sand.u32 %s74, 1
        %s398 = smul.addr %s397, 8
        %s399 = scalar_lea.vmem [#allocation4], %s398
        // Predicated region
        $region123: #{barlow_twins_loss.3} parent=117 // pred_check
          %p400 = pneg %p87
        $region124: #{barlow_twins_loss.3} parent=117 // pred_check_branch
          %402 = sbr.rel (%p400) target = $region126
        $region125: #{barlow_twins_loss.3} parent=117 // pred_region
          _
        $region126: #{barlow_twins_loss.3} parent=117 // pred_fallthru
          _
        %s403 = sand.u32 %s46, 1
        %s404 = sand.u32 %s46, 1
        %s405 = smul.addr %s404, 8
        %s406 = scalar_lea.vmem [#allocation3], %s405
        %p407 = pneg %p59
        %p408 = pneg %p56
        %s409 = sand.u32 %s74, 1
        %s410 = sand.u32 %s74, 1
        %s411 = smul.addr %s410, 8
        %s412 = scalar_lea.vmem [#allocation4], %s411
        %p413 = pneg %p87
        %p414 = pneg %p84
        %s415 = smul.u32 16, %s22
        %p416 = scmp.lt.s32.totalorder %s415, 31
        %s417 = scalar_select %p416, %s415, 31
        %s418 = smul.addr %s417, 8
        %s419 = scalar_lea.vmem %s2, %s418
        %p420 = pneg %p113
        %p421 = pneg %p110
        %p422 = scmp.lt.s32.totalorder %s23, 1
        %s423 = scalar_select %p422, %s23, 1
        %s424 = scalar_lea.vmem %s3, %s423
        %p425 = pneg %p139
        %p426 = pneg %p136
        %s427 = smul.u32 16, %s22
        %p428 = scmp.lt.s32.totalorder %s427, 31
        %s429 = scalar_select %p428, %s427, 31
        %s430 = smul.addr %s429, 8
        %s431 = scalar_lea.vmem %s4, %s430
        %p432 = pneg %p165
        %p433 = pneg %p162
        %p434 = scmp.lt.s32.totalorder %s23, 1
        %s435 = scalar_select %p434, %s23, 1
        %s436 = scalar_lea.vmem %s5, %s435
        %p437 = pneg %p191
        %p438 = pneg %p188
        %p439 = pneg %p219
        %p440 = pneg %p216
        %p441 = scmp.lt.s32.totalorder %s22, 1
        %s442 = scalar_select %p441, %s22, 1
        %p443 = scmp.lt.s32.totalorder %s23, 1
        %s444 = scalar_select %p443, %s23, 1
        %s445 = smul.addr %s442, 2
        %s446 = sadd.s32 %s444, %s445
        %s447 = smul.addr %s446, 8
        %s448 = scalar_lea.vmem %s6, %s447
        %s449 = smul.u32 2, %s24
        %s450 = smul.u32 2, %s24
        %s451 = smul.u32 16, %s22
        %p452 = scmp.lt.s32.totalorder %s451, 31
        %s453 = scalar_select %p452, %s451, 31
        %s454 = smul.addr %s453, 8
        %s455 = scalar_lea.vmem %s2, %s454
        %s456 = smul.u32 16, %s22
        %p457 = scmp.lt.s32.totalorder %s23, 1
        %s458 = scalar_select %p457, %s23, 1
        %s459 = scalar_lea.vmem %s3, %s458
        %s460 = smul.u32 16, %s22
        %p461 = scmp.lt.s32.totalorder %s460, 31
        %s462 = scalar_select %p461, %s460, 31
        %s463 = smul.addr %s462, 8
        %s464 = scalar_lea.vmem %s4, %s463
        %s465 = smul.u32 16, %s22
        %p466 = scmp.lt.s32.totalorder %s23, 1
        %s467 = scalar_select %p466, %s23, 1
        %s468 = scalar_lea.vmem %s5, %s467
        %p469 = scmp.lt.s32.totalorder %s22, 1
        %s470 = scalar_select %p469, %s22, 1
        %p471 = scmp.lt.s32.totalorder %s23, 1
        %s472 = scalar_select %p471, %s23, 1
        %s473 = smul.addr %s470, 2
        %s474 = sadd.s32 %s472, %s473
        %s475 = smul.addr %s474, 8
        %s476 = scalar_lea.vmem %s6, %s475
        %p478 = scmp.eq.s32.totalorder %s24, 0
        // Predicated region
        $region127: #{barlow_twins_loss.3} parent=117 // pred_check
          %p479 = pneg %p478
        $region128: #{barlow_twins_loss.3} parent=117 // pred_check_branch
          %481 = sbr.rel (%p479) target = $region130
        $region129: #{barlow_twins_loss.3} parent=117 // pred_region
          %482 = vst [vmem:[#allocation2] sm:$0xff] 0.0
          %483 = vst [vmem:[#allocation2 + $0x8] sm:$0xff] 0.0
          %484 = vst [vmem:[#allocation2 + $0x10] sm:$0xff] 0.0
          %485 = vst [vmem:[#allocation2 + $0x18] sm:$0xff] 0.0
          %486 = vst [vmem:[#allocation2 + $0x20] sm:$0xff] 0.0
          %487 = vst [vmem:[#allocation2 + $0x28] sm:$0xff] 0.0
          %488 = vst [vmem:[#allocation2 + $0x30] sm:$0xff] 0.0
          %489 = vst [vmem:[#allocation2 + $0x38] sm:$0xff] 0.0
          %490 = vst [vmem:[#allocation2 + $0x40] sm:$0xff] 0.0
          %491 = vst [vmem:[#allocation2 + $0x48] sm:$0xff] 0.0
          %492 = vst [vmem:[#allocation2 + $0x50] sm:$0xff] 0.0
          %493 = vst [vmem:[#allocation2 + $0x58] sm:$0xff] 0.0
          %494 = vst [vmem:[#allocation2 + $0x60] sm:$0xff] 0.0
          %495 = vst [vmem:[#allocation2 + $0x68] sm:$0xff] 0.0
          %496 = vst [vmem:[#allocation2 + $0x70] sm:$0xff] 0.0
          %497 = vst [vmem:[#allocation2 + $0x78] sm:$0xff] 0.0
          %498 = vst [vmem:[%s476] sm:$0xff] 0.0
        $region130: #{barlow_twins_loss.3} parent=117 // pred_fallthru
          _
        %v499 = vld [vmem:[#allocation2] sm:$0xff]
        %v500 = vld [vmem:[#allocation2 + $0x8] sm:$0xff]
        %v501 = vld [vmem:[#allocation2 + $0x10] sm:$0xff]
        %v502 = vld [vmem:[#allocation2 + $0x18] sm:$0xff]
        %v503 = vld [vmem:[#allocation2 + $0x20] sm:$0xff]
        %v504 = vld [vmem:[#allocation2 + $0x28] sm:$0xff]
        %v505 = vld [vmem:[#allocation2 + $0x30] sm:$0xff]
        %v506 = vld [vmem:[#allocation2 + $0x38] sm:$0xff]
        %v507 = vld [vmem:[#allocation2 + $0x40] sm:$0xff]
        %v508 = vld [vmem:[#allocation2 + $0x48] sm:$0xff]
        %v509 = vld [vmem:[#allocation2 + $0x50] sm:$0xff]
        %v510 = vld [vmem:[#allocation2 + $0x58] sm:$0xff]
        %v511 = vld [vmem:[#allocation2 + $0x60] sm:$0xff]
        %v512 = vld [vmem:[#allocation2 + $0x68] sm:$0xff]
        %v513 = vld [vmem:[#allocation2 + $0x70] sm:$0xff]
        %v514 = vld [vmem:[#allocation2 + $0x78] sm:$0xff]
        %v515 = vld [vmem:[%s392] sm:$0xf]
        %v516 = vld [vmem:[%s392 + $0x4] sm:$0xf]
        %v517 = vld [vmem:[%s399] sm:$0xf]
        %v518 = vld [vmem:[%s399 + $0x4] sm:$0xf]
        %v521 = vunpack.c.l.b16 %v515
        %v522 = vunpack.c.l.b16 %v516
        %v523 = vpack.c.b16 %v522, %v521
        %525 = vxpose.xlu0.c.b16.start [1/8] %v523, 128
        %526 = vxpose.xlu0.c.b16.cont [2/8] 0, 128
        %527 = vxpose.xlu0.c.b16.cont [3/8] 0, 128
        %528 = vxpose.xlu0.c.b16.cont [4/8] 0, 128
        %529 = vxpose.xlu0.c.b16.cont [5/8] 0, 128
        %530 = vxpose.xlu0.c.b16.cont [6/8] 0, 128
        %531 = vxpose.xlu0.c.b16.cont [7/8] 0, 128
        %532 = vxpose.xlu0.c.b16.end [8/8] 0, 128
        %v533 = vpop.trf.xlu0
        %v534 = vpop.trf.xlu0
        %v535 = vpop.trf.xlu0
        %v536 = vpop.trf.xlu0
        %v537 = vpop.trf.xlu0
        %v538 = vpop.trf.xlu0
        %v539 = vpop.trf.xlu0
        %v540 = vpop.trf.xlu0
        %v543 = vunpack.c.l.b16 %v517
        %v544 = vunpack.c.l.b16 %v518
        %v545 = vpack.c.b16 %v544, %v543
        %vm547 = vcmask 130048
        %v549 = vsel %vm547, %v533, 0
        %v552 = vsel %vm547, %v534, 0
        %v555 = vsel %vm547, %v535, 0
        %v558 = vsel %vm547, %v536, 0
        %v561 = vsel %vm547, %v537, 0
        %v564 = vsel %vm547, %v538, 0
        %v567 = vsel %vm547, %v539, 0
        %v570 = vsel %vm547, %v540, 0
        %572 = vmatpush.bf16.msra.mxu0 0
        %573 = vmatpush.bf16.msra.mxu0 0
        %574 = vmatpush.bf16.msra.mxu0 0
        %575 = vmatpush.bf16.msra.mxu0 0
        %576 = vmatpush.bf16.msra.mxu0 0
        %577 = vmatpush.bf16.msra.mxu0 0
        %578 = vmatpush.bf16.msra.mxu0 0
        %579 = vmatpush.bf16.msra.mxu0 %v545
        %580 = vmatmul.bf16.gmra.mxu0 %v549
        %v581 = vpop.f32.mrf.mxu0
        %v582 = vadd.f32 0.0, %v581
        %v583 = vpop.f32.mrf.mxu0
        %v584 = vadd.f32 0.0, %v583
        %585 = vmatmul.bf16.gmra.mxu0 %v552
        %v586 = vpop.f32.mrf.mxu0
        %v587 = vadd.f32 0.0, %v586
        %v588 = vpop.f32.mrf.mxu0
        %v589 = vadd.f32 0.0, %v588
        %590 = vmatmul.bf16.gmra.mxu0 %v555
        %v591 = vpop.f32.mrf.mxu0
        %v592 = vadd.f32 0.0, %v591
        %v593 = vpop.f32.mrf.mxu0
        %v594 = vadd.f32 0.0, %v593
        %595 = vmatmul.bf16.gmra.mxu0 %v558
        %v596 = vpop.f32.mrf.mxu0
        %v597 = vadd.f32 0.0, %v596
        %v598 = vpop.f32.mrf.mxu0
        %v599 = vadd.f32 0.0, %v598
        %600 = vmatmul.bf16.gmra.mxu0 %v561
        %v601 = vpop.f32.mrf.mxu0
        %v602 = vadd.f32 0.0, %v601
        %v603 = vpop.f32.mrf.mxu0
        %v604 = vadd.f32 0.0, %v603
        %605 = vmatmul.bf16.gmra.mxu0 %v564
        %v606 = vpop.f32.mrf.mxu0
        %v607 = vadd.f32 0.0, %v606
        %v608 = vpop.f32.mrf.mxu0
        %v609 = vadd.f32 0.0, %v608
        %610 = vmatmul.bf16.gmra.mxu0 %v567
        %v611 = vpop.f32.mrf.mxu0
        %v612 = vadd.f32 0.0, %v611
        %v613 = vpop.f32.mrf.mxu0
        %v614 = vadd.f32 0.0, %v613
        %615 = vmatmul.bf16.gmra.mxu0 %v570
        %v616 = vpop.f32.mrf.mxu0
        %v617 = vadd.f32 0.0, %v616
        %v618 = vpop.f32.mrf.mxu0
        %v619 = vadd.f32 0.0, %v618
        %620 = vdwg.mxu0
        %v621 = vadd.f32 %v499, %v582
        %v622 = vadd.f32 %v500, %v584
        %v623 = vadd.f32 %v501, %v587
        %v624 = vadd.f32 %v502, %v589
        %v625 = vadd.f32 %v503, %v592
        %v626 = vadd.f32 %v504, %v594
        %v627 = vadd.f32 %v505, %v597
        %v628 = vadd.f32 %v506, %v599
        %v629 = vadd.f32 %v507, %v602
        %v630 = vadd.f32 %v508, %v604
        %v631 = vadd.f32 %v509, %v607
        %v632 = vadd.f32 %v510, %v609
        %v633 = vadd.f32 %v511, %v612
        %v634 = vadd.f32 %v512, %v614
        %v635 = vadd.f32 %v513, %v617
        %v636 = vadd.f32 %v514, %v619
        %637 = vst [vmem:[#allocation2] sm:$0xff] %v621
        %638 = vst [vmem:[#allocation2 + $0x8] sm:$0xff] %v622
        %639 = vst [vmem:[#allocation2 + $0x10] sm:$0xff] %v623
        %640 = vst [vmem:[#allocation2 + $0x18] sm:$0xff] %v624
        %641 = vst [vmem:[#allocation2 + $0x20] sm:$0xff] %v625
        %642 = vst [vmem:[#allocation2 + $0x28] sm:$0xff] %v626
        %643 = vst [vmem:[#allocation2 + $0x30] sm:$0xff] %v627
        %644 = vst [vmem:[#allocation2 + $0x38] sm:$0xff] %v628
        %645 = vst [vmem:[#allocation2 + $0x40] sm:$0xff] %v629
        %646 = vst [vmem:[#allocation2 + $0x48] sm:$0xff] %v630
        %647 = vst [vmem:[#allocation2 + $0x50] sm:$0xff] %v631
        %648 = vst [vmem:[#allocation2 + $0x58] sm:$0xff] %v632
        %649 = vst [vmem:[#allocation2 + $0x60] sm:$0xff] %v633
        %650 = vst [vmem:[#allocation2 + $0x68] sm:$0xff] %v634
        %651 = vst [vmem:[#allocation2 + $0x70] sm:$0xff] %v635
        %652 = vst [vmem:[#allocation2 + $0x78] sm:$0xff] %v636
        %p653 = scmp.eq.s32.totalorder %s24, 3
        // Predicated region
        $region131: #{barlow_twins_loss.3} parent=117 // pred_check
          %p654 = pneg %p653
        $region132: #{barlow_twins_loss.3} parent=117 // pred_check_branch
          %656 = sbr.rel (%p654) target = $region134
        $region133: #{barlow_twins_loss.3} parent=117 // pred_region
          %v657 = vld [vmem:[#allocation2] sm:$0xff]
          %v658 = vld [vmem:[#allocation2 + $0x8] sm:$0xff]
          %v659 = vld [vmem:[#allocation2 + $0x10] sm:$0xff]
          %v660 = vld [vmem:[#allocation2 + $0x18] sm:$0xff]
          %v661 = vld [vmem:[#allocation2 + $0x20] sm:$0xff]
          %v662 = vld [vmem:[#allocation2 + $0x28] sm:$0xff]
          %v663 = vld [vmem:[#allocation2 + $0x30] sm:$0xff]
          %v664 = vld [vmem:[#allocation2 + $0x38] sm:$0xff]
          %v665 = vld [vmem:[#allocation2 + $0x40] sm:$0xff]
          %v666 = vld [vmem:[#allocation2 + $0x48] sm:$0xff]
          %v667 = vld [vmem:[#allocation2 + $0x50] sm:$0xff]
          %v668 = vld [vmem:[#allocation2 + $0x58] sm:$0xff]
          %v669 = vld [vmem:[#allocation2 + $0x60] sm:$0xff]
          %v670 = vld [vmem:[#allocation2 + $0x68] sm:$0xff]
          %v671 = vld [vmem:[#allocation2 + $0x70] sm:$0xff]
          %v672 = vld [vmem:[#allocation2 + $0x78] sm:$0xff]
          %v673 = vld [vmem:[%s455] sm:$0xff]
          %v674 = vld [vmem:[%s455 + $0x8] sm:$0xff]
          %v675 = vld [vmem:[%s455 + $0x10] sm:$0xff]
          %v676 = vld [vmem:[%s455 + $0x18] sm:$0xff]
          %v677 = vld [vmem:[%s455 + $0x20] sm:$0xff]
          %v678 = vld [vmem:[%s455 + $0x28] sm:$0xff]
          %v679 = vld [vmem:[%s455 + $0x30] sm:$0xff]
          %v680 = vld [vmem:[%s455 + $0x38] sm:$0xff]
          %v681 = vld [vmem:[%s455 + $0x40] sm:$0xff]
          %v682 = vld [vmem:[%s455 + $0x48] sm:$0xff]
          %v683 = vld [vmem:[%s455 + $0x50] sm:$0xff]
          %v684 = vld [vmem:[%s455 + $0x58] sm:$0xff]
          %v685 = vld [vmem:[%s455 + $0x60] sm:$0xff]
          %v686 = vld [vmem:[%s455 + $0x68] sm:$0xff]
          %v687 = vld [vmem:[%s455 + $0x70] sm:$0xff]
          %v688 = vld [vmem:[%s455 + $0x78] sm:$0xff]
          %690 = vset.pattern.permute.xlu0 0
          %691 = vperm.xlu0 %690, %v673
          %v692 = vpop.permute.xlu0 %691
          %695 = vset.pattern.permute.xlu0 0
          %696 = vperm.xlu0 %695, %v674
          %v697 = vpop.permute.xlu0 %696
          %700 = vset.pattern.permute.xlu0 0
          %701 = vperm.xlu0 %700, %v675
          %v702 = vpop.permute.xlu0 %701
          %705 = vset.pattern.permute.xlu0 0
          %706 = vperm.xlu0 %705, %v676
          %v707 = vpop.permute.xlu0 %706
          %710 = vset.pattern.permute.xlu0 0
          %711 = vperm.xlu0 %710, %v677
          %v712 = vpop.permute.xlu0 %711
          %715 = vset.pattern.permute.xlu0 0
          %716 = vperm.xlu0 %715, %v678
          %v717 = vpop.permute.xlu0 %716
          %720 = vset.pattern.permute.xlu0 0
          %721 = vperm.xlu0 %720, %v679
          %v722 = vpop.permute.xlu0 %721
          %725 = vset.pattern.permute.xlu0 0
          %726 = vperm.xlu0 %725, %v680
          %v727 = vpop.permute.xlu0 %726
          %730 = vset.pattern.permute.xlu0 0
          %731 = vperm.xlu0 %730, %v681
          %v732 = vpop.permute.xlu0 %731
          %735 = vset.pattern.permute.xlu0 0
          %736 = vperm.xlu0 %735, %v682
          %v737 = vpop.permute.xlu0 %736
          %740 = vset.pattern.permute.xlu0 0
          %741 = vperm.xlu0 %740, %v683
          %v742 = vpop.permute.xlu0 %741
          %745 = vset.pattern.permute.xlu0 0
          %746 = vperm.xlu0 %745, %v684
          %v747 = vpop.permute.xlu0 %746
          %750 = vset.pattern.permute.xlu0 0
          %751 = vperm.xlu0 %750, %v685
          %v752 = vpop.permute.xlu0 %751
          %755 = vset.pattern.permute.xlu0 0
          %756 = vperm.xlu0 %755, %v686
          %v757 = vpop.permute.xlu0 %756
          %760 = vset.pattern.permute.xlu0 0
          %761 = vperm.xlu0 %760, %v687
          %v762 = vpop.permute.xlu0 %761
          %765 = vset.pattern.permute.xlu0 0
          %766 = vperm.xlu0 %765, %v688
          %v767 = vpop.permute.xlu0 %766
          %v769 = vmul.f32 %v657, %v692
          %v770 = vmul.f32 %v658, %v697
          %v771 = vmul.f32 %v659, %v702
          %v772 = vmul.f32 %v660, %v707
          %v773 = vmul.f32 %v661, %v712
          %v774 = vmul.f32 %v662, %v717
          %v775 = vmul.f32 %v663, %v722
          %v776 = vmul.f32 %v664, %v727
          %v777 = vmul.f32 %v665, %v732
          %v778 = vmul.f32 %v666, %v737
          %v779 = vmul.f32 %v667, %v742
          %v780 = vmul.f32 %v668, %v747
          %v781 = vmul.f32 %v669, %v752
          %v782 = vmul.f32 %v670, %v757
          %v783 = vmul.f32 %v671, %v762
          %v784 = vmul.f32 %v672, %v767
          %v785 = vld [vmem:[%s459] sm:$0x1]
          %v787 = vperm.slane %v785, 0
          %v789 = vmul.f32 %v769, %v787
          %v790 = vmul.f32 %v770, %v787
          %v791 = vmul.f32 %v771, %v787
          %v792 = vmul.f32 %v772, %v787
          %v793 = vmul.f32 %v773, %v787
          %v794 = vmul.f32 %v774, %v787
          %v795 = vmul.f32 %v775, %v787
          %v796 = vmul.f32 %v776, %v787
          %v797 = vmul.f32 %v777, %v787
          %v798 = vmul.f32 %v778, %v787
          %v799 = vmul.f32 %v779, %v787
          %v800 = vmul.f32 %v780, %v787
          %v801 = vmul.f32 %v781, %v787
          %v802 = vmul.f32 %v782, %v787
          %v803 = vmul.f32 %v783, %v787
          %v804 = vmul.f32 %v784, %v787
          %v805 = vld [vmem:[%s464] sm:$0xff]
          %v806 = vld [vmem:[%s464 + $0x8] sm:$0xff]
          %v807 = vld [vmem:[%s464 + $0x10] sm:$0xff]
          %v808 = vld [vmem:[%s464 + $0x18] sm:$0xff]
          %v809 = vld [vmem:[%s464 + $0x20] sm:$0xff]
          %v810 = vld [vmem:[%s464 + $0x28] sm:$0xff]
          %v811 = vld [vmem:[%s464 + $0x30] sm:$0xff]
          %v812 = vld [vmem:[%s464 + $0x38] sm:$0xff]
          %v813 = vld [vmem:[%s464 + $0x40] sm:$0xff]
          %v814 = vld [vmem:[%s464 + $0x48] sm:$0xff]
          %v815 = vld [vmem:[%s464 + $0x50] sm:$0xff]
          %v816 = vld [vmem:[%s464 + $0x58] sm:$0xff]
          %v817 = vld [vmem:[%s464 + $0x60] sm:$0xff]
          %v818 = vld [vmem:[%s464 + $0x68] sm:$0xff]
          %v819 = vld [vmem:[%s464 + $0x70] sm:$0xff]
          %v820 = vld [vmem:[%s464 + $0x78] sm:$0xff]
          %v821 = vld [vmem:[%s468] sm:$0x1]
          %823 = vset.pattern.permute.xlu0 0
          %824 = vperm.xlu0 %823, %v805
          %v825 = vpop.permute.xlu0 %824
          %828 = vset.pattern.permute.xlu0 0
          %829 = vperm.xlu0 %828, %v806
          %v830 = vpop.permute.xlu0 %829
          %833 = vset.pattern.permute.xlu0 0
          %834 = vperm.xlu0 %833, %v807
          %v835 = vpop.permute.xlu0 %834
          %838 = vset.pattern.permute.xlu0 0
          %839 = vperm.xlu0 %838, %v808
          %v840 = vpop.permute.xlu0 %839
          %843 = vset.pattern.permute.xlu0 0
          %844 = vperm.xlu0 %843, %v809
          %v845 = vpop.permute.xlu0 %844
          %848 = vset.pattern.permute.xlu0 0
          %849 = vperm.xlu0 %848, %v810
          %v850 = vpop.permute.xlu0 %849
          %853 = vset.pattern.permute.xlu0 0
          %854 = vperm.xlu0 %853, %v811
          %v855 = vpop.permute.xlu0 %854
          %858 = vset.pattern.permute.xlu0 0
          %859 = vperm.xlu0 %858, %v812
          %v860 = vpop.permute.xlu0 %859
          %863 = vset.pattern.permute.xlu0 0
          %864 = vperm.xlu0 %863, %v813
          %v865 = vpop.permute.xlu0 %864
          %868 = vset.pattern.permute.xlu0 0
          %869 = vperm.xlu0 %868, %v814
          %v870 = vpop.permute.xlu0 %869
          %873 = vset.pattern.permute.xlu0 0
          %874 = vperm.xlu0 %873, %v815
          %v875 = vpop.permute.xlu0 %874
          %878 = vset.pattern.permute.xlu0 0
          %879 = vperm.xlu0 %878, %v816
          %v880 = vpop.permute.xlu0 %879
          %883 = vset.pattern.permute.xlu0 0
          %884 = vperm.xlu0 %883, %v817
          %v885 = vpop.permute.xlu0 %884
          %888 = vset.pattern.permute.xlu0 0
          %889 = vperm.xlu0 %888, %v818
          %v890 = vpop.permute.xlu0 %889
          %893 = vset.pattern.permute.xlu0 0
          %894 = vperm.xlu0 %893, %v819
          %v895 = vpop.permute.xlu0 %894
          %898 = vset.pattern.permute.xlu0 0
          %899 = vperm.xlu0 %898, %v820
          %v900 = vpop.permute.xlu0 %899
          %v903 = vperm.slane %v821, 0
          %v905 = vmul.f32 %v825, %v903
          %v906 = vmul.f32 %v830, %v903
          %v907 = vmul.f32 %v835, %v903
          %v908 = vmul.f32 %v840, %v903
          %v909 = vmul.f32 %v845, %v903
          %v910 = vmul.f32 %v850, %v903
          %v911 = vmul.f32 %v855, %v903
          %v912 = vmul.f32 %v860, %v903
          %v913 = vmul.f32 %v865, %v903
          %v914 = vmul.f32 %v870, %v903
          %v915 = vmul.f32 %v875, %v903
          %v916 = vmul.f32 %v880, %v903
          %v917 = vmul.f32 %v885, %v903
          %v918 = vmul.f32 %v890, %v903
          %v919 = vmul.f32 %v895, %v903
          %v920 = vmul.f32 %v900, %v903
          %v921 = vsub.f32 %v789, %v905
          %v922 = vsub.f32 %v790, %v906
          %v923 = vsub.f32 %v791, %v907
          %v924 = vsub.f32 %v792, %v908
          %v925 = vsub.f32 %v793, %v909
          %v926 = vsub.f32 %v794, %v910
          %v927 = vsub.f32 %v795, %v911
          %v928 = vsub.f32 %v796, %v912
          %v929 = vsub.f32 %v797, %v913
          %v930 = vsub.f32 %v798, %v914
          %v931 = vsub.f32 %v799, %v915
          %v932 = vsub.f32 %v800, %v916
          %v933 = vsub.f32 %v801, %v917
          %v934 = vsub.f32 %v802, %v918
          %v935 = vsub.f32 %v803, %v919
          %v936 = vsub.f32 %v804, %v920
          %v937 = vlaneseq
          %v938 = vshrl.u32 %v937, 7
          %v939 = vadd.s32 %v938, 8
          %v940 = vadd.s32 %v938, 16
          %v941 = vadd.s32 %v938, 24
          %v942 = vadd.s32 %v938, 32
          %v943 = vadd.s32 %v938, 40
          %v944 = vadd.s32 %v938, 48
          %v945 = vadd.s32 %v938, 56
          %v946 = vadd.s32 %v938, 64
          %v947 = vadd.s32 %v938, 72
          %v948 = vadd.s32 %v938, 80
          %v949 = vadd.s32 %v938, 88
          %v950 = vadd.s32 %v938, 96
          %v951 = vadd.s32 %v938, 104
          %v952 = vadd.s32 %v938, 112
          %v953 = vadd.s32 %v938, 120
          %s954 = smul.u32 %s22, 128
          %v955 = vstv %s954
          %v956 = vadd.s32 %v938, %v955
          %v957 = vadd.s32 %v939, %v955
          %v958 = vadd.s32 %v940, %v955
          %v959 = vadd.s32 %v941, %v955
          %v960 = vadd.s32 %v942, %v955
          %v961 = vadd.s32 %v943, %v955
          %v962 = vadd.s32 %v944, %v955
          %v963 = vadd.s32 %v945, %v955
          %v964 = vadd.s32 %v946, %v955
          %v965 = vadd.s32 %v947, %v955
          %v966 = vadd.s32 %v948, %v955
          %v967 = vadd.s32 %v949, %v955
          %v968 = vadd.s32 %v950, %v955
          %v969 = vadd.s32 %v951, %v955
          %v970 = vadd.s32 %v952, %v955
          %v971 = vadd.s32 %v953, %v955
          %v972 = vlaneseq
          %v973 = vand.u32 %v972, 127
          %s974 = smul.u32 %s23, 128
          %v975 = vstv %s974
          %v976 = vadd.s32 %v973, %v975
          %vm977 = vcmp.eq.s32.totalorder %v956, %v976
          %vm978 = vcmp.eq.s32.totalorder %v957, %v976
          %vm979 = vcmp.eq.s32.totalorder %v958, %v976
          %vm980 = vcmp.eq.s32.totalorder %v959, %v976
          %vm981 = vcmp.eq.s32.totalorder %v960, %v976
          %vm982 = vcmp.eq.s32.totalorder %v961, %v976
          %vm983 = vcmp.eq.s32.totalorder %v962, %v976
          %vm984 = vcmp.eq.s32.totalorder %v963, %v976
          %vm985 = vcmp.eq.s32.totalorder %v964, %v976
          %vm986 = vcmp.eq.s32.totalorder %v965, %v976
          %vm987 = vcmp.eq.s32.totalorder %v966, %v976
          %vm988 = vcmp.eq.s32.totalorder %v967, %v976
          %vm989 = vcmp.eq.s32.totalorder %v968, %v976
          %vm990 = vcmp.eq.s32.totalorder %v969, %v976
          %vm991 = vcmp.eq.s32.totalorder %v970, %v976
          %vm992 = vcmp.eq.s32.totalorder %v971, %v976
          %vm993 = vcmp.lt.s32.totalorder %v956, 200
          %vm994 = vcmp.lt.s32.totalorder %v957, 200
          %vm995 = vcmp.lt.s32.totalorder %v958, 200
          %vm996 = vcmp.lt.s32.totalorder %v959, 200
          %vm997 = vcmp.lt.s32.totalorder %v960, 200
          %vm998 = vcmp.lt.s32.totalorder %v961, 200
          %vm999 = vcmp.lt.s32.totalorder %v962, 200
          %vm1000 = vcmp.lt.s32.totalorder %v963, 200
          %vm1001 = vcmp.lt.s32.totalorder %v964, 200
          %vm1002 = vcmp.lt.s32.totalorder %v965, 200
          %vm1003 = vcmp.lt.s32.totalorder %v966, 200
          %vm1004 = vcmp.lt.s32.totalorder %v967, 200
          %vm1005 = vcmp.lt.s32.totalorder %v968, 200
          %vm1006 = vcmp.lt.s32.totalorder %v969, 200
          %vm1007 = vcmp.lt.s32.totalorder %v970, 200
          %vm1008 = vcmp.lt.s32.totalorder %v971, 200
          %vm1009 = vmand %vm977, %vm993
          %vm1010 = vmand %vm978, %vm994
          %vm1011 = vmand %vm979, %vm995
          %vm1012 = vmand %vm980, %vm996
          %vm1013 = vmand %vm981, %vm997
          %vm1014 = vmand %vm982, %vm998
          %vm1015 = vmand %vm983, %vm999
          %vm1016 = vmand %vm984, %vm1000
          %vm1017 = vmand %vm985, %vm1001
          %vm1018 = vmand %vm986, %vm1002
          %vm1019 = vmand %vm987, %vm1003
          %vm1020 = vmand %vm988, %vm1004
          %vm1021 = vmand %vm989, %vm1005
          %vm1022 = vmand %vm990, %vm1006
          %vm1023 = vmand %vm991, %vm1007
          %vm1024 = vmand %vm992, %vm1008
          %v1025 = vsub.f32 %v921, 1.0
          %v1026 = vsub.f32 %v922, 1.0
          %v1027 = vsub.f32 %v923, 1.0
          %v1028 = vsub.f32 %v924, 1.0
          %v1029 = vsub.f32 %v925, 1.0
          %v1030 = vsub.f32 %v926, 1.0
          %v1031 = vsub.f32 %v927, 1.0
          %v1032 = vsub.f32 %v928, 1.0
          %v1033 = vsub.f32 %v929, 1.0
          %v1034 = vsub.f32 %v930, 1.0
          %v1035 = vsub.f32 %v931, 1.0
          %v1036 = vsub.f32 %v932, 1.0
          %v1037 = vsub.f32 %v933, 1.0
          %v1038 = vsub.f32 %v934, 1.0
          %v1039 = vsub.f32 %v935, 1.0
          %v1040 = vsub.f32 %v936, 1.0
          %v1041 = vmul.f32 %v1025, %v1025
          %v1042 = vmul.f32 %v1026, %v1026
          %v1043 = vmul.f32 %v1027, %v1027
          %v1044 = vmul.f32 %v1028, %v1028
          %v1045 = vmul.f32 %v1029, %v1029
          %v1046 = vmul.f32 %v1030, %v1030
          %v1047 = vmul.f32 %v1031, %v1031
          %v1048 = vmul.f32 %v1032, %v1032
          %v1049 = vmul.f32 %v1033, %v1033
          %v1050 = vmul.f32 %v1034, %v1034
          %v1051 = vmul.f32 %v1035, %v1035
          %v1052 = vmul.f32 %v1036, %v1036
          %v1053 = vmul.f32 %v1037, %v1037
          %v1054 = vmul.f32 %v1038, %v1038
          %v1055 = vmul.f32 %v1039, %v1039
          %v1056 = vmul.f32 %v1040, %v1040
          %v1057 = vmul.f32 %v921, %v921
          %v1058 = vmul.f32 %v922, %v922
          %v1059 = vmul.f32 %v923, %v923
          %v1060 = vmul.f32 %v924, %v924
          %v1061 = vmul.f32 %v925, %v925
          %v1062 = vmul.f32 %v926, %v926
          %v1063 = vmul.f32 %v927, %v927
          %v1064 = vmul.f32 %v928, %v928
          %v1065 = vmul.f32 %v929, %v929
          %v1066 = vmul.f32 %v930, %v930
          %v1067 = vmul.f32 %v931, %v931
          %v1068 = vmul.f32 %v932, %v932
          %v1069 = vmul.f32 %v933, %v933
          %v1070 = vmul.f32 %v934, %v934
          %v1071 = vmul.f32 %v935, %v935
          %v1072 = vmul.f32 %v936, %v936
          %v1073 = vmul.f32 %v1057, 0.005
          %v1074 = vmul.f32 %v1058, 0.005
          %v1075 = vmul.f32 %v1059, 0.005
          %v1076 = vmul.f32 %v1060, 0.005
          %v1077 = vmul.f32 %v1061, 0.005
          %v1078 = vmul.f32 %v1062, 0.005
          %v1079 = vmul.f32 %v1063, 0.005
          %v1080 = vmul.f32 %v1064, 0.005
          %v1081 = vmul.f32 %v1065, 0.005
          %v1082 = vmul.f32 %v1066, 0.005
          %v1083 = vmul.f32 %v1067, 0.005
          %v1084 = vmul.f32 %v1068, 0.005
          %v1085 = vmul.f32 %v1069, 0.005
          %v1086 = vmul.f32 %v1070, 0.005
          %v1087 = vmul.f32 %v1071, 0.005
          %v1088 = vmul.f32 %v1072, 0.005
          %v1089 = vsel %vm1009, %v1041, %v1073
          %v1090 = vsel %vm1010, %v1042, %v1074
          %v1091 = vsel %vm1011, %v1043, %v1075
          %v1092 = vsel %vm1012, %v1044, %v1076
          %v1093 = vsel %vm1013, %v1045, %v1077
          %v1094 = vsel %vm1014, %v1046, %v1078
          %v1095 = vsel %vm1015, %v1047, %v1079
          %v1096 = vsel %vm1016, %v1048, %v1080
          %v1097 = vsel %vm1017, %v1049, %v1081
          %v1098 = vsel %vm1018, %v1050, %v1082
          %v1099 = vsel %vm1019, %v1051, %v1083
          %v1100 = vsel %vm1020, %v1052, %v1084
          %v1101 = vsel %vm1021, %v1053, %v1085
          %v1102 = vsel %vm1022, %v1054, %v1086
          %v1103 = vsel %vm1023, %v1055, %v1087
          %v1104 = vsel %vm1024, %v1056, %v1088
          %v1105 = vadd.f32 %v1089, %v1090
          %v1106 = vadd.f32 %v1105, %v1091
          %v1107 = vadd.f32 %v1106, %v1092
          %v1108 = vadd.f32 %v1107, %v1093
          %v1109 = vadd.f32 %v1108, %v1094
          %v1110 = vadd.f32 %v1109, %v1095
          %v1111 = vadd.f32 %v1110, %v1096
          %v1112 = vadd.f32 %v1111, %v1097
          %v1113 = vadd.f32 %v1112, %v1098
          %v1114 = vadd.f32 %v1113, %v1099
          %v1115 = vadd.f32 %v1114, %v1100
          %v1116 = vadd.f32 %v1115, %v1101
          %v1117 = vadd.f32 %v1116, %v1102
          %v1118 = vadd.f32 %v1117, %v1103
          %v1119 = vadd.f32 %v1118, %v1104
          %1120 = vadd.xlane.f32.xlu0 %v1119
          %v1121 = vpop.xlane.xlu0 %1120
          %v1122 = vrot.slane %v1121, 4
          %v1123 = vadd.f32 %v1121, %v1122
          %v1124 = vrot.slane %v1123, 2
          %v1125 = vadd.f32 %v1123, %v1124
          %v1126 = vrot.slane %v1125, 1
          %v1127 = vadd.f32 %v1125, %v1126
          %s1128 = vtos %v1127
          %vm1129 = vcmp.eq.s32.totalorder %v938, 0
          %vm1130 = vcmp.eq.s32.totalorder %v973, 0
          %vm1131 = vmand %vm1129, %vm1130
          %v1132 = vstv %s1128
          %v1133 = vsel %vm1131, %v1132, 0.0
          %1134 = vst [vmem:[%s476] sm:$0xff] %v1133
        $region134: #{barlow_twins_loss.3} parent=117 // pred_fallthru
          _
        %p1135 = scmp.lt.s32.totalorder %s22, 1
        %s1136 = scalar_select %p1135, %s22, 1
        %p1137 = scmp.lt.s32.totalorder %s23, 1
        %s1138 = scalar_select %p1137, %s23, 1
        %s1139 = smul.addr %s1136, 2
        %s1140 = sadd.s32 %s1138, %s1139
        %s1141 = smul.addr %s1140, 8
        %s1142 = scalar_lea.vmem %s6, %s1141
        // Predicated region
        $region135: #{barlow_twins_loss.3} parent=117 // pred_check
          %p1143 = pneg %p216
        $region136: #{barlow_twins_loss.3} parent=117 // pred_check_branch
          %1145 = sbr.rel (%p1143) target = $region138
        $region137: #{barlow_twins_loss.3} parent=117 // pred_region
          _
        $region138: #{barlow_twins_loss.3} parent=117 // pred_fallthru
          _
      $region118: #{barlow_twins_loss.3} parent=5 // pred_fallthru
        _
      %p1146 = scmp.le.s32.totalorder 2, %s12
      // Predicated region
      $region139: #{barlow_twins_loss.3} parent=5 // pred_check
        %p1147 = pneg %p1146
      $region140: #{barlow_twins_loss.3} parent=5 // pred_check_branch
        %1149 = sbr.rel (%p1147) target = $region142
      $region141: #{barlow_twins_loss.3} parent=5 // pred_region
        %s1150 = ssub.s32 %s12, 2
        // Predicated region
        $region143: #{barlow_twins_loss.3} parent=141 // pred_check
          %p1151 = pneg %p222
        $region144: #{barlow_twins_loss.3} parent=141 // pred_check_branch
          %1153 = sbr.rel (%p1151) target = $region146
        $region145: #{barlow_twins_loss.3} parent=141 // pred_region
          %p1154 = scmp.lt.s32.totalorder %s25, 1
          %s1155 = scalar_select %p1154, %s25, 1
          %p1156 = scmp.lt.s32.totalorder %s26, 1
          %s1157 = scalar_select %p1156, %s26, 1
          %s1158 = smul.addr %s1155, 2
          %s1159 = sadd.s32 %s1157, %s1158
          %s1160 = smul.addr %s1159, 8
          %s1161 = scalar_lea.vmem %s6, %s1160
        $region146: #{barlow_twins_loss.3} parent=141 // pred_fallthru
          _
      $region142: #{barlow_twins_loss.3} parent=5 // pred_fallthru
        _
    $region6: #{barlow_twins_loss.3} parent=1 // loop_footer
      %s16 = sadd.s32 1, %s12
    $region7: #{barlow_twins_loss.3} parent=1 // loop_footer_branch
      %11 = sbr.rel target = $region3
    $region8: #{barlow_twins_loss.3} parent=1 // loop_exit
      _

</llo_original>
